<compile_context>
chip_gen: v7x
topology: tpu7x:2x2x1
jax: 0.10.0
libtpu: 0.0.40
codegen_flags: <defaults>
</compile_context>

<pallas_src>
import functools

import jax
import jax.numpy as jnp
import numpy as np
from jax.experimental import pallas as pl
from jax.experimental.pallas import tpu as pltpu

_LANE = 128
_SUBLANE = 8

_TOTAL_SCRATCH_BUDGET = 16 * 1024 * 1024   # VMEM double-buffers across all tensors
_PER_CHUNK_CAP = 4 * 1024 * 1024           # largest single DMA chunk
_PER_CHUNK_FLOOR = 128 * 1024


def _round_up(x, m):
    return (x + m - 1) // m * m


def _padded_elems(shape):
    """Approximate element count of a VMEM tile including (8,128) padding."""
    s = list(shape)
    if len(s) == 1:
        return _round_up(s[0], _SUBLANE * _LANE)
    s[-1] = _round_up(s[-1], _LANE)
    s[-2] = _round_up(s[-2], _SUBLANE)
    out = 1
    for d in s:
        out *= d
    return out


def _plan_tensor(shape, dtype, chunk_budget_bytes):
    """Chunk one tensor along its leading axis into multi-MiB DMA chunks."""
    shape = tuple(int(d) for d in shape)
    d0, rest = shape[0], shape[1:]
    itemsize = jnp.dtype(dtype).itemsize

    # Padded bytes contributed by ONE index of the leading axis.
    if len(rest) == 0:
        row_bytes = itemsize
    elif len(rest) == 1:
        row_bytes = _round_up(rest[0], _LANE) * itemsize
    else:
        lead = 1
        for d in rest[:-2]:
            lead *= d
        row_bytes = (lead * _round_up(rest[-2], _SUBLANE)
                     * _round_up(rest[-1], _LANE) * itemsize)

    chunk_rows = max(1, min(d0, chunk_budget_bytes // max(1, row_bytes)))
    # Keep chunk boundaries friendly to the (sublane, lane) layout.
    if len(rest) == 1 and chunk_rows >= _SUBLANE:
        chunk_rows -= chunk_rows % _SUBLANE
    if len(rest) == 0 and chunk_rows >= _LANE:
        chunk_rows -= chunk_rows % _LANE

    chunks = []
    s = 0
    while s < d0:
        c = min(chunk_rows, d0 - s)
        chunks.append((s, c))
        s += c
    nbuf = 2 if len(chunks) > 1 else 1
    slot_shape = (chunk_rows,) + rest
    return {
        "chunks": chunks,
        "nbuf": nbuf,
        "slot_shape": slot_shape,
        "slot_bytes": _padded_elems(slot_shape) * itemsize,
        "count": int(np.prod(shape)) if shape else 1,
    }


def _build_kernel(plans, targets):
    """One kernel instance: per tensor, stream chunks and accumulate sum((x-t)^2)."""
    num_t = len(plans)

    def kernel(*refs):
        x_refs = refs[:num_t]
        out_ref = refs[num_t]
        scratch = refs[num_t + 1:]
        bufs = scratch[0::2]
        sems = scratch[1::2]

        def make_copy(t, chunk_idx):
            start, size = plans[t]["chunks"][chunk_idx]
            slot = chunk_idx % plans[t]["nbuf"]
            return pltpu.make_async_copy(
                x_refs[t].at[pl.ds(start, size)],
                bufs[t].at[slot, pl.ds(0, size)],
                sems[t].at[slot],
            )

        # Prefetch the first chunk of every tensor up front so the DMA for
        # tensor t+1 overlaps compute of tensor t.
        pending = []
        for t in range(num_t):
            cp = make_copy(t, 0)
            cp.start()
            pending.append(cp)

        for t in range(num_t):
            chunks = plans[t]["chunks"]
            nbuf = plans[t]["nbuf"]
            tgt = jnp.float32(float(targets[t]))
            inv_n = jnp.float32(1.0 / float(plans[t]["count"]))
            total = jnp.float32(0.0)
            nxt = pending[t]
            for c, (_, size) in enumerate(chunks):
                slot = c % nbuf
                nxt.wait()
                # Prefetch the next chunk into the other slot before computing.
                if c + 1 < len(chunks):
                    nxt = make_copy(t, c + 1)
                    nxt.start()
                # Native dtype in HBM/VMEM; cast to f32 only in registers.
                x = bufs[t][slot, pl.ds(0, size)].astype(jnp.float32)
                d = x - tgt
                total = total + jnp.sum(d * d)
            out_ref[t] = total * inv_n

    return kernel


def _collapse_leading(x):
    """Merge all leading dims (layout-free: last two dims untouched)."""
    if x.ndim == 0:
        return x.reshape((1,))
    if x.ndim <= 3:
        return x
    lead = int(np.prod(x.shape[:-2]))
    return x.reshape((lead,) + x.shape[-2:])


@functools.partial(jax.jit, static_argnums=0)
def _fused_lsgan_loss(targets, *tensors):
    """sum_s mean((x_s - t_s)^2) over all tensors with one Pallas call."""
    num_t = len(tensors)
    tensors = tuple(_collapse_leading(t) for t in tensors)

    chunk_budget = max(
        _PER_CHUNK_FLOOR,
        min(_PER_CHUNK_CAP, _TOTAL_SCRATCH_BUDGET // max(1, 2 * num_t)),
    )
    plans = [_plan_tensor(t.shape, t.dtype, chunk_budget) for t in tensors]

    scratch_shapes = []
    for p, t in zip(plans, tensors):
        scratch_shapes.append(pltpu.VMEM((p["nbuf"],) + p["slot_shape"], t.dtype))
        scratch_shapes.append(pltpu.SemaphoreType.DMA((p["nbuf"],)))

    scratch_bytes = sum(p["nbuf"] * p["slot_bytes"] for p in plans)
    vmem_limit = int(min(48 * 1024 * 1024,
                         max(24 * 1024 * 1024, 2 * scratch_bytes + (2 << 20))))

    seg_means = pl.pallas_call(
        _build_kernel(plans, targets),
        out_shape=jax.ShapeDtypeStruct((num_t,), jnp.float32),
        in_specs=[pl.BlockSpec(memory_space=pl.ANY)] * num_t,
        out_specs=pl.BlockSpec(memory_space=pltpu.SMEM),
        scratch_shapes=scratch_shapes,
        compiler_params=pltpu.CompilerParams(vmem_limit_bytes=vmem_limit),
    )(*tensors)

    return jnp.sum(seg_means)


def lsgan_d_loss(batch_data):
    """JAX/Pallas equivalent of LSGAN_D_Loss.forward."""
    tensors, targets = [], []
    for fake_logits, real_logits in zip(
        batch_data["predicted_fake_logits"],
        batch_data["predicted_clean_logits"],
    ):
        for i in range(len(fake_logits)):
            tensors.append(fake_logits[i])
            targets.append(0.0)   # F.mse_loss(fake, zeros_like)
            tensors.append(real_logits[i])
            targets.append(1.0)   # F.mse_loss(real, ones_like)

    if tensors:
        loss = _fused_lsgan_loss(tuple(targets), *tensors)
    else:
        loss = jnp.float32(0.0)
    batch_data["loss_D"] = loss
    return batch_data


if __name__ == "__main__":
    key = jax.random.PRNGKey(0)

    # Multi-scale, multi-discriminator logits (NCHW), as a discriminator
    # ensemble would produce. Two discriminators, two scales each.
    shapes = [[(2, 4, 16, 16), (2, 4, 8, 8)],
              [(2, 4, 16, 16), (2, 4, 8, 8)]]

    fake_logits, real_logits = [], []
    for disc_shapes in shapes:
        f_list, r_list = [], []
        for shp in disc_shapes:
            key, kf, kr = jax.random.split(key, 3)
            f_list.append(jax.random.normal(kf, shp, dtype=jnp.float32))
            r_list.append(jax.random.normal(kr, shp, dtype=jnp.float32))
        fake_logits.append(f_list)
        real_logits.append(r_list)

    batch_data = {
        "predicted_fake_logits": fake_logits,
        "predicted_clean_logits": real_logits,
    }

    out = lsgan_d_loss(batch_data)
    loss = jax.block_until_ready(out["loss_D"])

    # Pure-JAX reference check.
    ref = jnp.float32(0.0)
    for f_list, r_list in zip(fake_logits, real_logits):
        for f, r in zip(f_list, r_list):
            ref = ref + jnp.mean(f ** 2) + jnp.mean((r - 1.0) ** 2)
    assert jnp.allclose(loss, ref, rtol=1e-5, atol=1e-5), (loss, ref)

    print("KERNEL_OK")
</pallas_src>

<mosaic_0001>
module attributes {stable_mosaic.version = 11 : i64} {
  func.func @kernel(%arg0: memref<8x16x16xf32, #tpu.memory_space<any>>, %arg1: memref<8x16x16xf32, #tpu.memory_space<any>>, %arg2: memref<8x8x8xf32, #tpu.memory_space<any>>, %arg3: memref<8x8x8xf32, #tpu.memory_space<any>>, %arg4: memref<8x16x16xf32, #tpu.memory_space<any>>, %arg5: memref<8x16x16xf32, #tpu.memory_space<any>>, %arg6: memref<8x8x8xf32, #tpu.memory_space<any>>, %arg7: memref<8x8x8xf32, #tpu.memory_space<any>>, %arg8: memref<8xf32, #tpu.memory_space<smem>>, %arg9: memref<1x8x16x16xf32, #tpu.memory_space<vmem>>, %arg10: memref<1x!tpu.dma_semaphore, #tpu.memory_space<semaphore_mem>>, %arg11: memref<1x8x16x16xf32, #tpu.memory_space<vmem>>, %arg12: memref<1x!tpu.dma_semaphore, #tpu.memory_space<semaphore_mem>>, %arg13: memref<1x8x8x8xf32, #tpu.memory_space<vmem>>, %arg14: memref<1x!tpu.dma_semaphore, #tpu.memory_space<semaphore_mem>>, %arg15: memref<1x8x8x8xf32, #tpu.memory_space<vmem>>, %arg16: memref<1x!tpu.dma_semaphore, #tpu.memory_space<semaphore_mem>>, %arg17: memref<1x8x16x16xf32, #tpu.memory_space<vmem>>, %arg18: memref<1x!tpu.dma_semaphore, #tpu.memory_space<semaphore_mem>>, %arg19: memref<1x8x16x16xf32, #tpu.memory_space<vmem>>, %arg20: memref<1x!tpu.dma_semaphore, #tpu.memory_space<semaphore_mem>>, %arg21: memref<1x8x8x8xf32, #tpu.memory_space<vmem>>, %arg22: memref<1x!tpu.dma_semaphore, #tpu.memory_space<semaphore_mem>>, %arg23: memref<1x8x8x8xf32, #tpu.memory_space<vmem>>, %arg24: memref<1x!tpu.dma_semaphore, #tpu.memory_space<semaphore_mem>>) attributes {dimension_semantics = [], scalar_prefetch = 0 : i64, scratch_operands = 16 : i64, tpu.core_type = #tpu.core_type<tc>} {
    %c0_i32 = arith.constant 0 : i32
    %c0_i32_0 = arith.constant 0 : i32
    %c0_i32_1 = arith.constant 0 : i32
    %c0_i32_2 = arith.constant 0 : i32
    %c0_i32_3 = arith.constant 0 : i32
    %0 = tpu.memref_slice %arg0[%c0_i32_1, %c0_i32_2, %c0_i32_3] : memref<8x16x16xf32, #tpu.memory_space<any>> -> memref<8x16x16xf32, #tpu.memory_space<any>>
    %c0_i32_4 = arith.constant 0 : i32
    %c0_i32_5 = arith.constant 0 : i32
    %c0_i32_6 = arith.constant 0 : i32
    %1 = tpu.memref_slice %arg9[%c0_i32, %c0_i32_4, %c0_i32_5, %c0_i32_6] : memref<1x8x16x16xf32, #tpu.memory_space<vmem>> -> memref<1x8x16x16xf32, #tpu.memory_space<vmem>>
    %2 = tpu.memref_squeeze %1 : memref<1x8x16x16xf32, #tpu.memory_space<vmem>> -> memref<8x16x16xf32, #tpu.memory_space<vmem>>
    %3 = tpu.memref_slice %arg10[%c0_i32_0] : memref<1x!tpu.dma_semaphore, #tpu.memory_space<semaphore_mem>> -> memref<1x!tpu.dma_semaphore, #tpu.memory_space<semaphore_mem>>
    %4 = tpu.memref_squeeze %3 : memref<1x!tpu.dma_semaphore, #tpu.memory_space<semaphore_mem>> -> memref<!tpu.dma_semaphore, #tpu.memory_space<semaphore_mem>>
    tpu.enqueue_dma source(%0 : memref<8x16x16xf32, #tpu.memory_space<any>>) target(%2 : memref<8x16x16xf32, #tpu.memory_space<vmem>>) target_semaphore(%4 : memref<!tpu.dma_semaphore, #tpu.memory_space<semaphore_mem>>)
    %c0_i32_7 = arith.constant 0 : i32
    %c0_i32_8 = arith.constant 0 : i32
    %c0_i32_9 = arith.constant 0 : i32
    %c0_i32_10 = arith.constant 0 : i32
    %c0_i32_11 = arith.constant 0 : i32
    %5 = tpu.memref_slice %arg1[%c0_i32_9, %c0_i32_10, %c0_i32_11] : memref<8x16x16xf32, #tpu.memory_space<any>> -> memref<8x16x16xf32, #tpu.memory_space<any>>
    %c0_i32_12 = arith.constant 0 : i32
    %c0_i32_13 = arith.constant 0 : i32
    %c0_i32_14 = arith.constant 0 : i32
    %6 = tpu.memref_slice %arg11[%c0_i32_7, %c0_i32_12, %c0_i32_13, %c0_i32_14] : memref<1x8x16x16xf32, #tpu.memory_space<vmem>> -> memref<1x8x16x16xf32, #tpu.memory_space<vmem>>
    %7 = tpu.memref_squeeze %6 : memref<1x8x16x16xf32, #tpu.memory_space<vmem>> -> memref<8x16x16xf32, #tpu.memory_space<vmem>>
    %8 = tpu.memref_slice %arg12[%c0_i32_8] : memref<1x!tpu.dma_semaphore, #tpu.memory_space<semaphore_mem>> -> memref<1x!tpu.dma_semaphore, #tpu.memory_space<semaphore_mem>>
    %9 = tpu.memref_squeeze %8 : memref<1x!tpu.dma_semaphore, #tpu.memory_space<semaphore_mem>> -> memref<!tpu.dma_semaphore, #tpu.memory_space<semaphore_mem>>
    tpu.enqueue_dma source(%5 : memref<8x16x16xf32, #tpu.memory_space<any>>) target(%7 : memref<8x16x16xf32, #tpu.memory_space<vmem>>) target_semaphore(%9 : memref<!tpu.dma_semaphore, #tpu.memory_space<semaphore_mem>>)
    %c0_i32_15 = arith.constant 0 : i32
    %c0_i32_16 = arith.constant 0 : i32
    %c0_i32_17 = arith.constant 0 : i32
    %c0_i32_18 = arith.constant 0 : i32
    %c0_i32_19 = arith.constant 0 : i32
    %10 = tpu.memref_slice %arg2[%c0_i32_17, %c0_i32_18, %c0_i32_19] : memref<8x8x8xf32, #tpu.memory_space<any>> -> memref<8x8x8xf32, #tpu.memory_space<any>>
    %c0_i32_20 = arith.constant 0 : i32
    %c0_i32_21 = arith.constant 0 : i32
    %c0_i32_22 = arith.constant 0 : i32
    %11 = tpu.memref_slice %arg13[%c0_i32_15, %c0_i32_20, %c0_i32_21, %c0_i32_22] : memref<1x8x8x8xf32, #tpu.memory_space<vmem>> -> memref<1x8x8x8xf32, #tpu.memory_space<vmem>>
    %12 = tpu.memref_squeeze %11 : memref<1x8x8x8xf32, #tpu.memory_space<vmem>> -> memref<8x8x8xf32, #tpu.memory_space<vmem>>
    %13 = tpu.memref_slice %arg14[%c0_i32_16] : memref<1x!tpu.dma_semaphore, #tpu.memory_space<semaphore_mem>> -> memref<1x!tpu.dma_semaphore, #tpu.memory_space<semaphore_mem>>
    %14 = tpu.memref_squeeze %13 : memref<1x!tpu.dma_semaphore, #tpu.memory_space<semaphore_mem>> -> memref<!tpu.dma_semaphore, #tpu.memory_space<semaphore_mem>>
    tpu.enqueue_dma source(%10 : memref<8x8x8xf32, #tpu.memory_space<any>>) target(%12 : memref<8x8x8xf32, #tpu.memory_space<vmem>>) target_semaphore(%14 : memref<!tpu.dma_semaphore, #tpu.memory_space<semaphore_mem>>)
    %c0_i32_23 = arith.constant 0 : i32
    %c0_i32_24 = arith.constant 0 : i32
    %c0_i32_25 = arith.constant 0 : i32
    %c0_i32_26 = arith.constant 0 : i32
    %c0_i32_27 = arith.constant 0 : i32
    %15 = tpu.memref_slice %arg3[%c0_i32_25, %c0_i32_26, %c0_i32_27] : memref<8x8x8xf32, #tpu.memory_space<any>> -> memref<8x8x8xf32, #tpu.memory_space<any>>
    %c0_i32_28 = arith.constant 0 : i32
    %c0_i32_29 = arith.constant 0 : i32
    %c0_i32_30 = arith.constant 0 : i32
    %16 = tpu.memref_slice %arg15[%c0_i32_23, %c0_i32_28, %c0_i32_29, %c0_i32_30] : memref<1x8x8x8xf32, #tpu.memory_space<vmem>> -> memref<1x8x8x8xf32, #tpu.memory_space<vmem>>
    %17 = tpu.memref_squeeze %16 : memref<1x8x8x8xf32, #tpu.memory_space<vmem>> -> memref<8x8x8xf32, #tpu.memory_space<vmem>>
    %18 = tpu.memref_slice %arg16[%c0_i32_24] : memref<1x!tpu.dma_semaphore, #tpu.memory_space<semaphore_mem>> -> memref<1x!tpu.dma_semaphore, #tpu.memory_space<semaphore_mem>>
    %19 = tpu.memref_squeeze %18 : memref<1x!tpu.dma_semaphore, #tpu.memory_space<semaphore_mem>> -> memref<!tpu.dma_semaphore, #tpu.memory_space<semaphore_mem>>
    tpu.enqueue_dma source(%15 : memref<8x8x8xf32, #tpu.memory_space<any>>) target(%17 : memref<8x8x8xf32, #tpu.memory_space<vmem>>) target_semaphore(%19 : memref<!tpu.dma_semaphore, #tpu.memory_space<semaphore_mem>>)
    %c0_i32_31 = arith.constant 0 : i32
    %c0_i32_32 = arith.constant 0 : i32
    %c0_i32_33 = arith.constant 0 : i32
    %c0_i32_34 = arith.constant 0 : i32
    %c0_i32_35 = arith.constant 0 : i32
    %20 = tpu.memref_slice %arg4[%c0_i32_33, %c0_i32_34, %c0_i32_35] : memref<8x16x16xf32, #tpu.memory_space<any>> -> memref<8x16x16xf32, #tpu.memory_space<any>>
    %c0_i32_36 = arith.constant 0 : i32
    %c0_i32_37 = arith.constant 0 : i32
    %c0_i32_38 = arith.constant 0 : i32
    %21 = tpu.memref_slice %arg17[%c0_i32_31, %c0_i32_36, %c0_i32_37, %c0_i32_38] : memref<1x8x16x16xf32, #tpu.memory_space<vmem>> -> memref<1x8x16x16xf32, #tpu.memory_space<vmem>>
    %22 = tpu.memref_squeeze %21 : memref<1x8x16x16xf32, #tpu.memory_space<vmem>> -> memref<8x16x16xf32, #tpu.memory_space<vmem>>
    %23 = tpu.memref_slice %arg18[%c0_i32_32] : memref<1x!tpu.dma_semaphore, #tpu.memory_space<semaphore_mem>> -> memref<1x!tpu.dma_semaphore, #tpu.memory_space<semaphore_mem>>
    %24 = tpu.memref_squeeze %23 : memref<1x!tpu.dma_semaphore, #tpu.memory_space<semaphore_mem>> -> memref<!tpu.dma_semaphore, #tpu.memory_space<semaphore_mem>>
    tpu.enqueue_dma source(%20 : memref<8x16x16xf32, #tpu.memory_space<any>>) target(%22 : memref<8x16x16xf32, #tpu.memory_space<vmem>>) target_semaphore(%24 : memref<!tpu.dma_semaphore, #tpu.memory_space<semaphore_mem>>)
    %c0_i32_39 = arith.constant 0 : i32
    %c0_i32_40 = arith.constant 0 : i32
    %c0_i32_41 = arith.constant 0 : i32
    %c0_i32_42 = arith.constant 0 : i32
    %c0_i32_43 = arith.constant 0 : i32
    %25 = tpu.memref_slice %arg5[%c0_i32_41, %c0_i32_42, %c0_i32_43] : memref<8x16x16xf32, #tpu.memory_space<any>> -> memref<8x16x16xf32, #tpu.memory_space<any>>
    %c0_i32_44 = arith.constant 0 : i32
    %c0_i32_45 = arith.constant 0 : i32
    %c0_i32_46 = arith.constant 0 : i32
    %26 = tpu.memref_slice %arg19[%c0_i32_39, %c0_i32_44, %c0_i32_45, %c0_i32_46] : memref<1x8x16x16xf32, #tpu.memory_space<vmem>> -> memref<1x8x16x16xf32, #tpu.memory_space<vmem>>
    %27 = tpu.memref_squeeze %26 : memref<1x8x16x16xf32, #tpu.memory_space<vmem>> -> memref<8x16x16xf32, #tpu.memory_space<vmem>>
    %28 = tpu.memref_slice %arg20[%c0_i32_40] : memref<1x!tpu.dma_semaphore, #tpu.memory_space<semaphore_mem>> -> memref<1x!tpu.dma_semaphore, #tpu.memory_space<semaphore_mem>>
    %29 = tpu.memref_squeeze %28 : memref<1x!tpu.dma_semaphore, #tpu.memory_space<semaphore_mem>> -> memref<!tpu.dma_semaphore, #tpu.memory_space<semaphore_mem>>
    tpu.enqueue_dma source(%25 : memref<8x16x16xf32, #tpu.memory_space<any>>) target(%27 : memref<8x16x16xf32, #tpu.memory_space<vmem>>) target_semaphore(%29 : memref<!tpu.dma_semaphore, #tpu.memory_space<semaphore_mem>>)
    %c0_i32_47 = arith.constant 0 : i32
    %c0_i32_48 = arith.constant 0 : i32
    %c0_i32_49 = arith.constant 0 : i32
    %c0_i32_50 = arith.constant 0 : i32
    %c0_i32_51 = arith.constant 0 : i32
    %30 = tpu.memref_slice %arg6[%c0_i32_49, %c0_i32_50, %c0_i32_51] : memref<8x8x8xf32, #tpu.memory_space<any>> -> memref<8x8x8xf32, #tpu.memory_space<any>>
    %c0_i32_52 = arith.constant 0 : i32
    %c0_i32_53 = arith.constant 0 : i32
    %c0_i32_54 = arith.constant 0 : i32
    %31 = tpu.memref_slice %arg21[%c0_i32_47, %c0_i32_52, %c0_i32_53, %c0_i32_54] : memref<1x8x8x8xf32, #tpu.memory_space<vmem>> -> memref<1x8x8x8xf32, #tpu.memory_space<vmem>>
    %32 = tpu.memref_squeeze %31 : memref<1x8x8x8xf32, #tpu.memory_space<vmem>> -> memref<8x8x8xf32, #tpu.memory_space<vmem>>
    %33 = tpu.memref_slice %arg22[%c0_i32_48] : memref<1x!tpu.dma_semaphore, #tpu.memory_space<semaphore_mem>> -> memref<1x!tpu.dma_semaphore, #tpu.memory_space<semaphore_mem>>
    %34 = tpu.memref_squeeze %33 : memref<1x!tpu.dma_semaphore, #tpu.memory_space<semaphore_mem>> -> memref<!tpu.dma_semaphore, #tpu.memory_space<semaphore_mem>>
    tpu.enqueue_dma source(%30 : memref<8x8x8xf32, #tpu.memory_space<any>>) target(%32 : memref<8x8x8xf32, #tpu.memory_space<vmem>>) target_semaphore(%34 : memref<!tpu.dma_semaphore, #tpu.memory_space<semaphore_mem>>)
    %c0_i32_55 = arith.constant 0 : i32
    %c0_i32_56 = arith.constant 0 : i32
    %c0_i32_57 = arith.constant 0 : i32
    %c0_i32_58 = arith.constant 0 : i32
    %c0_i32_59 = arith.constant 0 : i32
    %35 = tpu.memref_slice %arg7[%c0_i32_57, %c0_i32_58, %c0_i32_59] : memref<8x8x8xf32, #tpu.memory_space<any>> -> memref<8x8x8xf32, #tpu.memory_space<any>>
    %c0_i32_60 = arith.constant 0 : i32
    %c0_i32_61 = arith.constant 0 : i32
    %c0_i32_62 = arith.constant 0 : i32
    %36 = tpu.memref_slice %arg23[%c0_i32_55, %c0_i32_60, %c0_i32_61, %c0_i32_62] : memref<1x8x8x8xf32, #tpu.memory_space<vmem>> -> memref<1x8x8x8xf32, #tpu.memory_space<vmem>>
    %37 = tpu.memref_squeeze %36 : memref<1x8x8x8xf32, #tpu.memory_space<vmem>> -> memref<8x8x8xf32, #tpu.memory_space<vmem>>
    %38 = tpu.memref_slice %arg24[%c0_i32_56] : memref<1x!tpu.dma_semaphore, #tpu.memory_space<semaphore_mem>> -> memref<1x!tpu.dma_semaphore, #tpu.memory_space<semaphore_mem>>
    %39 = tpu.memref_squeeze %38 : memref<1x!tpu.dma_semaphore, #tpu.memory_space<semaphore_mem>> -> memref<!tpu.dma_semaphore, #tpu.memory_space<semaphore_mem>>
    tpu.enqueue_dma source(%35 : memref<8x8x8xf32, #tpu.memory_space<any>>) target(%37 : memref<8x8x8xf32, #tpu.memory_space<vmem>>) target_semaphore(%39 : memref<!tpu.dma_semaphore, #tpu.memory_space<semaphore_mem>>)
    %c0_i32_63 = arith.constant 0 : i32
    %c0_i32_64 = arith.constant 0 : i32
    %c0_i32_65 = arith.constant 0 : i32
    %c0_i32_66 = arith.constant 0 : i32
    %c0_i32_67 = arith.constant 0 : i32
    %40 = tpu.memref_slice %arg0[%c0_i32_65, %c0_i32_66, %c0_i32_67] : memref<8x16x16xf32, #tpu.memory_space<any>> -> memref<8x16x16xf32, #tpu.memory_space<any>>
    %c0_i32_68 = arith.constant 0 : i32
    %c0_i32_69 = arith.constant 0 : i32
    %c0_i32_70 = arith.constant 0 : i32
    %41 = tpu.memref_slice %arg9[%c0_i32_63, %c0_i32_68, %c0_i32_69, %c0_i32_70] : memref<1x8x16x16xf32, #tpu.memory_space<vmem>> -> memref<1x8x16x16xf32, #tpu.memory_space<vmem>>
    %42 = tpu.memref_squeeze %41 : memref<1x8x16x16xf32, #tpu.memory_space<vmem>> -> memref<8x16x16xf32, #tpu.memory_space<vmem>>
    %43 = tpu.memref_slice %arg10[%c0_i32_64] : memref<1x!tpu.dma_semaphore, #tpu.memory_space<semaphore_mem>> -> memref<1x!tpu.dma_semaphore, #tpu.memory_space<semaphore_mem>>
    %44 = tpu.memref_squeeze %43 : memref<1x!tpu.dma_semaphore, #tpu.memory_space<semaphore_mem>> -> memref<!tpu.dma_semaphore, #tpu.memory_space<semaphore_mem>>
    tpu.wait_dma2 semaphore(%44 : memref<!tpu.dma_semaphore, #tpu.memory_space<semaphore_mem>>) src(%40 : memref<8x16x16xf32, #tpu.memory_space<any>>) dst(%42 : memref<8x16x16xf32, #tpu.memory_space<vmem>>)
    %c0 = arith.constant 0 : index
    %c0_71 = arith.constant 0 : index
    %c0_72 = arith.constant 0 : index
    %c0_73 = arith.constant 0 : index
    %45 = vector.load %arg9[%c0, %c0_71, %c0_72, %c0_73] : memref<1x8x16x16xf32, #tpu.memory_space<vmem>>, vector<1x8x16x16xf32>
    %46 = vector.shape_cast %45 : vector<1x8x16x16xf32> to vector<8x16x16xf32>
    %cst = arith.constant 0.000000e+00 : f32
    %47 = vector.broadcast %cst : f32 to vector<8x16x16xf32>
    %48 = arith.subf %46, %47 : vector<8x16x16xf32>
    %49 = arith.mulf %48, %48 : vector<8x16x16xf32>
    %50 = vector.shape_cast %49 : vector<8x16x16xf32> to vector<1x8x16x16xf32>
    %cst_74 = arith.constant dense<0.000000e+00> : vector<1xf32>
    %51 = vector.multi_reduction <add>, %50, %cst_74 [1, 2, 3] : vector<1x8x16x16xf32> to vector<1xf32>
    %52 = vector.shape_cast %51 : vector<1xf32> to vector<1x1x1x1xf32>
    %53 = vector.extract %52[0, 0, 0, 0] : f32 from vector<1x1x1x1xf32>
    %cst_75 = arith.constant 0.000000e+00 : f32
    %54 = arith.addf %cst_75, %53 : f32
    %cst_76 = arith.constant 4.8828125E-4 : f32
    %55 = arith.mulf %54, %cst_76 : f32
    %c0_77 = arith.constant 0 : index
    %56 = memref.load %arg8[%c0_77] : memref<8xf32, #tpu.memory_space<smem>>
    memref.store %55, %arg8[%c0_77] : memref<8xf32, #tpu.memory_space<smem>>
    %c0_i32_78 = arith.constant 0 : i32
    %c0_i32_79 = arith.constant 0 : i32
    %c0_i32_80 = arith.constant 0 : i32
    %c0_i32_81 = arith.constant 0 : i32
    %c0_i32_82 = arith.constant 0 : i32
    %57 = tpu.memref_slice %arg1[%c0_i32_80, %c0_i32_81, %c0_i32_82] : memref<8x16x16xf32, #tpu.memory_space<any>> -> memref<8x16x16xf32, #tpu.memory_space<any>>
    %c0_i32_83 = arith.constant 0 : i32
    %c0_i32_84 = arith.constant 0 : i32
    %c0_i32_85 = arith.constant 0 : i32
    %58 = tpu.memref_slice %arg11[%c0_i32_78, %c0_i32_83, %c0_i32_84, %c0_i32_85] : memref<1x8x16x16xf32, #tpu.memory_space<vmem>> -> memref<1x8x16x16xf32, #tpu.memory_space<vmem>>
    %59 = tpu.memref_squeeze %58 : memref<1x8x16x16xf32, #tpu.memory_space<vmem>> -> memref<8x16x16xf32, #tpu.memory_space<vmem>>
    %60 = tpu.memref_slice %arg12[%c0_i32_79] : memref<1x!tpu.dma_semaphore, #tpu.memory_space<semaphore_mem>> -> memref<1x!tpu.dma_semaphore, #tpu.memory_space<semaphore_mem>>
    %61 = tpu.memref_squeeze %60 : memref<1x!tpu.dma_semaphore, #tpu.memory_space<semaphore_mem>> -> memref<!tpu.dma_semaphore, #tpu.memory_space<semaphore_mem>>
    tpu.wait_dma2 semaphore(%61 : memref<!tpu.dma_semaphore, #tpu.memory_space<semaphore_mem>>) src(%57 : memref<8x16x16xf32, #tpu.memory_space<any>>) dst(%59 : memref<8x16x16xf32, #tpu.memory_space<vmem>>)
    %c0_86 = arith.constant 0 : index
    %c0_87 = arith.constant 0 : index
    %c0_88 = arith.constant 0 : index
    %c0_89 = arith.constant 0 : index
    %62 = vector.load %arg11[%c0_86, %c0_87, %c0_88, %c0_89] : memref<1x8x16x16xf32, #tpu.memory_space<vmem>>, vector<1x8x16x16xf32>
    %63 = vector.shape_cast %62 : vector<1x8x16x16xf32> to vector<8x16x16xf32>
    %cst_90 = arith.constant 1.000000e+00 : f32
    %64 = vector.broadcast %cst_90 : f32 to vector<8x16x16xf32>
    %65 = arith.subf %63, %64 : vector<8x16x16xf32>
    %66 = arith.mulf %65, %65 : vector<8x16x16xf32>
    %67 = vector.shape_cast %66 : vector<8x16x16xf32> to vector<1x8x16x16xf32>
    %cst_91 = arith.constant dense<0.000000e+00> : vector<1xf32>
    %68 = vector.multi_reduction <add>, %67, %cst_91 [1, 2, 3] : vector<1x8x16x16xf32> to vector<1xf32>
    %69 = vector.shape_cast %68 : vector<1xf32> to vector<1x1x1x1xf32>
    %70 = vector.extract %69[0, 0, 0, 0] : f32 from vector<1x1x1x1xf32>
    %cst_92 = arith.constant 0.000000e+00 : f32
    %71 = arith.addf %cst_92, %70 : f32
    %cst_93 = arith.constant 4.8828125E-4 : f32
    %72 = arith.mulf %71, %cst_93 : f32
    %c1 = arith.constant 1 : index
    %73 = memref.load %arg8[%c1] : memref<8xf32, #tpu.memory_space<smem>>
    memref.store %72, %arg8[%c1] : memref<8xf32, #tpu.memory_space<smem>>
    %c0_i32_94 = arith.constant 0 : i32
    %c0_i32_95 = arith.constant 0 : i32
    %c0_i32_96 = arith.constant 0 : i32
    %c0_i32_97 = arith.constant 0 : i32
    %c0_i32_98 = arith.constant 0 : i32
    %74 = tpu.memref_slice %arg2[%c0_i32_96, %c0_i32_97, %c0_i32_98] : memref<8x8x8xf32, #tpu.memory_space<any>> -> memref<8x8x8xf32, #tpu.memory_space<any>>
    %c0_i32_99 = arith.constant 0 : i32
    %c0_i32_100 = arith.constant 0 : i32
    %c0_i32_101 = arith.constant 0 : i32
    %75 = tpu.memref_slice %arg13[%c0_i32_94, %c0_i32_99, %c0_i32_100, %c0_i32_101] : memref<1x8x8x8xf32, #tpu.memory_space<vmem>> -> memref<1x8x8x8xf32, #tpu.memory_space<vmem>>
    %76 = tpu.memref_squeeze %75 : memref<1x8x8x8xf32, #tpu.memory_space<vmem>> -> memref<8x8x8xf32, #tpu.memory_space<vmem>>
    %77 = tpu.memref_slice %arg14[%c0_i32_95] : memref<1x!tpu.dma_semaphore, #tpu.memory_space<semaphore_mem>> -> memref<1x!tpu.dma_semaphore, #tpu.memory_space<semaphore_mem>>
    %78 = tpu.memref_squeeze %77 : memref<1x!tpu.dma_semaphore, #tpu.memory_space<semaphore_mem>> -> memref<!tpu.dma_semaphore, #tpu.memory_space<semaphore_mem>>
    tpu.wait_dma2 semaphore(%78 : memref<!tpu.dma_semaphore, #tpu.memory_space<semaphore_mem>>) src(%74 : memref<8x8x8xf32, #tpu.memory_space<any>>) dst(%76 : memref<8x8x8xf32, #tpu.memory_space<vmem>>)
    %c0_102 = arith.constant 0 : index
    %c0_103 = arith.constant 0 : index
    %c0_104 = arith.constant 0 : index
    %c0_105 = arith.constant 0 : index
    %79 = vector.load %arg13[%c0_102, %c0_103, %c0_104, %c0_105] : memref<1x8x8x8xf32, #tpu.memory_space<vmem>>, vector<1x8x8x8xf32>
    %80 = vector.shape_cast %79 : vector<1x8x8x8xf32> to vector<8x8x8xf32>
    %cst_106 = arith.constant 0.000000e+00 : f32
    %81 = vector.broadcast %cst_106 : f32 to vector<8x8x8xf32>
    %82 = arith.subf %80, %81 : vector<8x8x8xf32>
    %83 = arith.mulf %82, %82 : vector<8x8x8xf32>
    %84 = vector.shape_cast %83 : vector<8x8x8xf32> to vector<1x8x8x8xf32>
    %cst_107 = arith.constant dense<0.000000e+00> : vector<1xf32>
    %85 = vector.multi_reduction <add>, %84, %cst_107 [1, 2, 3] : vector<1x8x8x8xf32> to vector<1xf32>
    %86 = vector.shape_cast %85 : vector<1xf32> to vector<1x1x1x1xf32>
    %87 = vector.extract %86[0, 0, 0, 0] : f32 from vector<1x1x1x1xf32>
    %cst_108 = arith.constant 0.000000e+00 : f32
    %88 = arith.addf %cst_108, %87 : f32
    %cst_109 = arith.constant 0.001953125 : f32
    %89 = arith.mulf %88, %cst_109 : f32
    %c2 = arith.constant 2 : index
    %90 = memref.load %arg8[%c2] : memref<8xf32, #tpu.memory_space<smem>>
    memref.store %89, %arg8[%c2] : memref<8xf32, #tpu.memory_space<smem>>
    %c0_i32_110 = arith.constant 0 : i32
    %c0_i32_111 = arith.constant 0 : i32
    %c0_i32_112 = arith.constant 0 : i32
    %c0_i32_113 = arith.constant 0 : i32
    %c0_i32_114 = arith.constant 0 : i32
    %91 = tpu.memref_slice %arg3[%c0_i32_112, %c0_i32_113, %c0_i32_114] : memref<8x8x8xf32, #tpu.memory_space<any>> -> memref<8x8x8xf32, #tpu.memory_space<any>>
    %c0_i32_115 = arith.constant 0 : i32
    %c0_i32_116 = arith.constant 0 : i32
    %c0_i32_117 = arith.constant 0 : i32
    %92 = tpu.memref_slice %arg15[%c0_i32_110, %c0_i32_115, %c0_i32_116, %c0_i32_117] : memref<1x8x8x8xf32, #tpu.memory_space<vmem>> -> memref<1x8x8x8xf32, #tpu.memory_space<vmem>>
    %93 = tpu.memref_squeeze %92 : memref<1x8x8x8xf32, #tpu.memory_space<vmem>> -> memref<8x8x8xf32, #tpu.memory_space<vmem>>
    %94 = tpu.memref_slice %arg16[%c0_i32_111] : memref<1x!tpu.dma_semaphore, #tpu.memory_space<semaphore_mem>> -> memref<1x!tpu.dma_semaphore, #tpu.memory_space<semaphore_mem>>
    %95 = tpu.memref_squeeze %94 : memref<1x!tpu.dma_semaphore, #tpu.memory_space<semaphore_mem>> -> memref<!tpu.dma_semaphore, #tpu.memory_space<semaphore_mem>>
    tpu.wait_dma2 semaphore(%95 : memref<!tpu.dma_semaphore, #tpu.memory_space<semaphore_mem>>) src(%91 : memref<8x8x8xf32, #tpu.memory_space<any>>) dst(%93 : memref<8x8x8xf32, #tpu.memory_space<vmem>>)
    %c0_118 = arith.constant 0 : index
    %c0_119 = arith.constant 0 : index
    %c0_120 = arith.constant 0 : index
    %c0_121 = arith.constant 0 : index
    %96 = vector.load %arg15[%c0_118, %c0_119, %c0_120, %c0_121] : memref<1x8x8x8xf32, #tpu.memory_space<vmem>>, vector<1x8x8x8xf32>
    %97 = vector.shape_cast %96 : vector<1x8x8x8xf32> to vector<8x8x8xf32>
    %cst_122 = arith.constant 1.000000e+00 : f32
    %98 = vector.broadcast %cst_122 : f32 to vector<8x8x8xf32>
    %99 = arith.subf %97, %98 : vector<8x8x8xf32>
    %100 = arith.mulf %99, %99 : vector<8x8x8xf32>
    %101 = vector.shape_cast %100 : vector<8x8x8xf32> to vector<1x8x8x8xf32>
    %cst_123 = arith.constant dense<0.000000e+00> : vector<1xf32>
    %102 = vector.multi_reduction <add>, %101, %cst_123 [1, 2, 3] : vector<1x8x8x8xf32> to vector<1xf32>
    %103 = vector.shape_cast %102 : vector<1xf32> to vector<1x1x1x1xf32>
    %104 = vector.extract %103[0, 0, 0, 0] : f32 from vector<1x1x1x1xf32>
    %cst_124 = arith.constant 0.000000e+00 : f32
    %105 = arith.addf %cst_124, %104 : f32
    %cst_125 = arith.constant 0.001953125 : f32
    %106 = arith.mulf %105, %cst_125 : f32
    %c3 = arith.constant 3 : index
    %107 = memref.load %arg8[%c3] : memref<8xf32, #tpu.memory_space<smem>>
    memref.store %106, %arg8[%c3] : memref<8xf32, #tpu.memory_space<smem>>
    %c0_i32_126 = arith.constant 0 : i32
    %c0_i32_127 = arith.constant 0 : i32
    %c0_i32_128 = arith.constant 0 : i32
    %c0_i32_129 = arith.constant 0 : i32
    %c0_i32_130 = arith.constant 0 : i32
    %108 = tpu.memref_slice %arg4[%c0_i32_128, %c0_i32_129, %c0_i32_130] : memref<8x16x16xf32, #tpu.memory_space<any>> -> memref<8x16x16xf32, #tpu.memory_space<any>>
    %c0_i32_131 = arith.constant 0 : i32
    %c0_i32_132 = arith.constant 0 : i32
    %c0_i32_133 = arith.constant 0 : i32
    %109 = tpu.memref_slice %arg17[%c0_i32_126, %c0_i32_131, %c0_i32_132, %c0_i32_133] : memref<1x8x16x16xf32, #tpu.memory_space<vmem>> -> memref<1x8x16x16xf32, #tpu.memory_space<vmem>>
    %110 = tpu.memref_squeeze %109 : memref<1x8x16x16xf32, #tpu.memory_space<vmem>> -> memref<8x16x16xf32, #tpu.memory_space<vmem>>
    %111 = tpu.memref_slice %arg18[%c0_i32_127] : memref<1x!tpu.dma_semaphore, #tpu.memory_space<semaphore_mem>> -> memref<1x!tpu.dma_semaphore, #tpu.memory_space<semaphore_mem>>
    %112 = tpu.memref_squeeze %111 : memref<1x!tpu.dma_semaphore, #tpu.memory_space<semaphore_mem>> -> memref<!tpu.dma_semaphore, #tpu.memory_space<semaphore_mem>>
    tpu.wait_dma2 semaphore(%112 : memref<!tpu.dma_semaphore, #tpu.memory_space<semaphore_mem>>) src(%108 : memref<8x16x16xf32, #tpu.memory_space<any>>) dst(%110 : memref<8x16x16xf32, #tpu.memory_space<vmem>>)
    %c0_134 = arith.constant 0 : index
    %c0_135 = arith.constant 0 : index
    %c0_136 = arith.constant 0 : index
    %c0_137 = arith.constant 0 : index
    %113 = vector.load %arg17[%c0_134, %c0_135, %c0_136, %c0_137] : memref<1x8x16x16xf32, #tpu.memory_space<vmem>>, vector<1x8x16x16xf32>
    %114 = vector.shape_cast %113 : vector<1x8x16x16xf32> to vector<8x16x16xf32>
    %cst_138 = arith.constant 0.000000e+00 : f32
    %115 = vector.broadcast %cst_138 : f32 to vector<8x16x16xf32>
    %116 = arith.subf %114, %115 : vector<8x16x16xf32>
    %117 = arith.mulf %116, %116 : vector<8x16x16xf32>
    %118 = vector.shape_cast %117 : vector<8x16x16xf32> to vector<1x8x16x16xf32>
    %cst_139 = arith.constant dense<0.000000e+00> : vector<1xf32>
    %119 = vector.multi_reduction <add>, %118, %cst_139 [1, 2, 3] : vector<1x8x16x16xf32> to vector<1xf32>
    %120 = vector.shape_cast %119 : vector<1xf32> to vector<1x1x1x1xf32>
    %121 = vector.extract %120[0, 0, 0, 0] : f32 from vector<1x1x1x1xf32>
    %cst_140 = arith.constant 0.000000e+00 : f32
    %122 = arith.addf %cst_140, %121 : f32
    %cst_141 = arith.constant 4.8828125E-4 : f32
    %123 = arith.mulf %122, %cst_141 : f32
    %c4 = arith.constant 4 : index
    %124 = memref.load %arg8[%c4] : memref<8xf32, #tpu.memory_space<smem>>
    memref.store %123, %arg8[%c4] : memref<8xf32, #tpu.memory_space<smem>>
    %c0_i32_142 = arith.constant 0 : i32
    %c0_i32_143 = arith.constant 0 : i32
    %c0_i32_144 = arith.constant 0 : i32
    %c0_i32_145 = arith.constant 0 : i32
    %c0_i32_146 = arith.constant 0 : i32
    %125 = tpu.memref_slice %arg5[%c0_i32_144, %c0_i32_145, %c0_i32_146] : memref<8x16x16xf32, #tpu.memory_space<any>> -> memref<8x16x16xf32, #tpu.memory_space<any>>
    %c0_i32_147 = arith.constant 0 : i32
    %c0_i32_148 = arith.constant 0 : i32
    %c0_i32_149 = arith.constant 0 : i32
    %126 = tpu.memref_slice %arg19[%c0_i32_142, %c0_i32_147, %c0_i32_148, %c0_i32_149] : memref<1x8x16x16xf32, #tpu.memory_space<vmem>> -> memref<1x8x16x16xf32, #tpu.memory_space<vmem>>
    %127 = tpu.memref_squeeze %126 : memref<1x8x16x16xf32, #tpu.memory_space<vmem>> -> memref<8x16x16xf32, #tpu.memory_space<vmem>>
    %128 = tpu.memref_slice %arg20[%c0_i32_143] : memref<1x!tpu.dma_semaphore, #tpu.memory_space<semaphore_mem>> -> memref<1x!tpu.dma_semaphore, #tpu.memory_space<semaphore_mem>>
    %129 = tpu.memref_squeeze %128 : memref<1x!tpu.dma_semaphore, #tpu.memory_space<semaphore_mem>> -> memref<!tpu.dma_semaphore, #tpu.memory_space<semaphore_mem>>
    tpu.wait_dma2 semaphore(%129 : memref<!tpu.dma_semaphore, #tpu.memory_space<semaphore_mem>>) src(%125 : memref<8x16x16xf32, #tpu.memory_space<any>>) dst(%127 : memref<8x16x16xf32, #tpu.memory_space<vmem>>)
    %c0_150 = arith.constant 0 : index
    %c0_151 = arith.constant 0 : index
    %c0_152 = arith.constant 0 : index
    %c0_153 = arith.constant 0 : index
    %130 = vector.load %arg19[%c0_150, %c0_151, %c0_152, %c0_153] : memref<1x8x16x16xf32, #tpu.memory_space<vmem>>, vector<1x8x16x16xf32>
    %131 = vector.shape_cast %130 : vector<1x8x16x16xf32> to vector<8x16x16xf32>
    %cst_154 = arith.constant 1.000000e+00 : f32
    %132 = vector.broadcast %cst_154 : f32 to vector<8x16x16xf32>
    %133 = arith.subf %131, %132 : vector<8x16x16xf32>
    %134 = arith.mulf %133, %133 : vector<8x16x16xf32>
    %135 = vector.shape_cast %134 : vector<8x16x16xf32> to vector<1x8x16x16xf32>
    %cst_155 = arith.constant dense<0.000000e+00> : vector<1xf32>
    %136 = vector.multi_reduction <add>, %135, %cst_155 [1, 2, 3] : vector<1x8x16x16xf32> to vector<1xf32>
    %137 = vector.shape_cast %136 : vector<1xf32> to vector<1x1x1x1xf32>
    %138 = vector.extract %137[0, 0, 0, 0] : f32 from vector<1x1x1x1xf32>
    %cst_156 = arith.constant 0.000000e+00 : f32
    %139 = arith.addf %cst_156, %138 : f32
    %cst_157 = arith.constant 4.8828125E-4 : f32
    %140 = arith.mulf %139, %cst_157 : f32
    %c5 = arith.constant 5 : index
    %141 = memref.load %arg8[%c5] : memref<8xf32, #tpu.memory_space<smem>>
    memref.store %140, %arg8[%c5] : memref<8xf32, #tpu.memory_space<smem>>
    %c0_i32_158 = arith.constant 0 : i32
    %c0_i32_159 = arith.constant 0 : i32
    %c0_i32_160 = arith.constant 0 : i32
    %c0_i32_161 = arith.constant 0 : i32
    %c0_i32_162 = arith.constant 0 : i32
    %142 = tpu.memref_slice %arg6[%c0_i32_160, %c0_i32_161, %c0_i32_162] : memref<8x8x8xf32, #tpu.memory_space<any>> -> memref<8x8x8xf32, #tpu.memory_space<any>>
    %c0_i32_163 = arith.constant 0 : i32
    %c0_i32_164 = arith.constant 0 : i32
    %c0_i32_165 = arith.constant 0 : i32
    %143 = tpu.memref_slice %arg21[%c0_i32_158, %c0_i32_163, %c0_i32_164, %c0_i32_165] : memref<1x8x8x8xf32, #tpu.memory_space<vmem>> -> memref<1x8x8x8xf32, #tpu.memory_space<vmem>>
    %144 = tpu.memref_squeeze %143 : memref<1x8x8x8xf32, #tpu.memory_space<vmem>> -> memref<8x8x8xf32, #tpu.memory_space<vmem>>
    %145 = tpu.memref_slice %arg22[%c0_i32_159] : memref<1x!tpu.dma_semaphore, #tpu.memory_space<semaphore_mem>> -> memref<1x!tpu.dma_semaphore, #tpu.memory_space<semaphore_mem>>
    %146 = tpu.memref_squeeze %145 : memref<1x!tpu.dma_semaphore, #tpu.memory_space<semaphore_mem>> -> memref<!tpu.dma_semaphore, #tpu.memory_space<semaphore_mem>>
    tpu.wait_dma2 semaphore(%146 : memref<!tpu.dma_semaphore, #tpu.memory_space<semaphore_mem>>) src(%142 : memref<8x8x8xf32, #tpu.memory_space<any>>) dst(%144 : memref<8x8x8xf32, #tpu.memory_space<vmem>>)
    %c0_166 = arith.constant 0 : index
    %c0_167 = arith.constant 0 : index
    %c0_168 = arith.constant 0 : index
    %c0_169 = arith.constant 0 : index
    %147 = vector.load %arg21[%c0_166, %c0_167, %c0_168, %c0_169] : memref<1x8x8x8xf32, #tpu.memory_space<vmem>>, vector<1x8x8x8xf32>
    %148 = vector.shape_cast %147 : vector<1x8x8x8xf32> to vector<8x8x8xf32>
    %cst_170 = arith.constant 0.000000e+00 : f32
    %149 = vector.broadcast %cst_170 : f32 to vector<8x8x8xf32>
    %150 = arith.subf %148, %149 : vector<8x8x8xf32>
    %151 = arith.mulf %150, %150 : vector<8x8x8xf32>
    %152 = vector.shape_cast %151 : vector<8x8x8xf32> to vector<1x8x8x8xf32>
    %cst_171 = arith.constant dense<0.000000e+00> : vector<1xf32>
    %153 = vector.multi_reduction <add>, %152, %cst_171 [1, 2, 3] : vector<1x8x8x8xf32> to vector<1xf32>
    %154 = vector.shape_cast %153 : vector<1xf32> to vector<1x1x1x1xf32>
    %155 = vector.extract %154[0, 0, 0, 0] : f32 from vector<1x1x1x1xf32>
    %cst_172 = arith.constant 0.000000e+00 : f32
    %156 = arith.addf %cst_172, %155 : f32
    %cst_173 = arith.constant 0.001953125 : f32
    %157 = arith.mulf %156, %cst_173 : f32
    %c6 = arith.constant 6 : index
    %158 = memref.load %arg8[%c6] : memref<8xf32, #tpu.memory_space<smem>>
    memref.store %157, %arg8[%c6] : memref<8xf32, #tpu.memory_space<smem>>
    %c0_i32_174 = arith.constant 0 : i32
    %c0_i32_175 = arith.constant 0 : i32
    %c0_i32_176 = arith.constant 0 : i32
    %c0_i32_177 = arith.constant 0 : i32
    %c0_i32_178 = arith.constant 0 : i32
    %159 = tpu.memref_slice %arg7[%c0_i32_176, %c0_i32_177, %c0_i32_178] : memref<8x8x8xf32, #tpu.memory_space<any>> -> memref<8x8x8xf32, #tpu.memory_space<any>>
    %c0_i32_179 = arith.constant 0 : i32
    %c0_i32_180 = arith.constant 0 : i32
    %c0_i32_181 = arith.constant 0 : i32
    %160 = tpu.memref_slice %arg23[%c0_i32_174, %c0_i32_179, %c0_i32_180, %c0_i32_181] : memref<1x8x8x8xf32, #tpu.memory_space<vmem>> -> memref<1x8x8x8xf32, #tpu.memory_space<vmem>>
    %161 = tpu.memref_squeeze %160 : memref<1x8x8x8xf32, #tpu.memory_space<vmem>> -> memref<8x8x8xf32, #tpu.memory_space<vmem>>
    %162 = tpu.memref_slice %arg24[%c0_i32_175] : memref<1x!tpu.dma_semaphore, #tpu.memory_space<semaphore_mem>> -> memref<1x!tpu.dma_semaphore, #tpu.memory_space<semaphore_mem>>
    %163 = tpu.memref_squeeze %162 : memref<1x!tpu.dma_semaphore, #tpu.memory_space<semaphore_mem>> -> memref<!tpu.dma_semaphore, #tpu.memory_space<semaphore_mem>>
    tpu.wait_dma2 semaphore(%163 : memref<!tpu.dma_semaphore, #tpu.memory_space<semaphore_mem>>) src(%159 : memref<8x8x8xf32, #tpu.memory_space<any>>) dst(%161 : memref<8x8x8xf32, #tpu.memory_space<vmem>>)
    %c0_182 = arith.constant 0 : index
    %c0_183 = arith.constant 0 : index
    %c0_184 = arith.constant 0 : index
    %c0_185 = arith.constant 0 : index
    %164 = vector.load %arg23[%c0_182, %c0_183, %c0_184, %c0_185] : memref<1x8x8x8xf32, #tpu.memory_space<vmem>>, vector<1x8x8x8xf32>
    %165 = vector.shape_cast %164 : vector<1x8x8x8xf32> to vector<8x8x8xf32>
    %cst_186 = arith.constant 1.000000e+00 : f32
    %166 = vector.broadcast %cst_186 : f32 to vector<8x8x8xf32>
    %167 = arith.subf %165, %166 : vector<8x8x8xf32>
    %168 = arith.mulf %167, %167 : vector<8x8x8xf32>
    %169 = vector.shape_cast %168 : vector<8x8x8xf32> to vector<1x8x8x8xf32>
    %cst_187 = arith.constant dense<0.000000e+00> : vector<1xf32>
    %170 = vector.multi_reduction <add>, %169, %cst_187 [1, 2, 3] : vector<1x8x8x8xf32> to vector<1xf32>
    %171 = vector.shape_cast %170 : vector<1xf32> to vector<1x1x1x1xf32>
    %172 = vector.extract %171[0, 0, 0, 0] : f32 from vector<1x1x1x1xf32>
    %cst_188 = arith.constant 0.000000e+00 : f32
    %173 = arith.addf %cst_188, %172 : f32
    %cst_189 = arith.constant 0.001953125 : f32
    %174 = arith.mulf %173, %cst_189 : f32
    %c7 = arith.constant 7 : index
    %175 = memref.load %arg8[%c7] : memref<8xf32, #tpu.memory_space<smem>>
    memref.store %174, %arg8[%c7] : memref<8xf32, #tpu.memory_space<smem>>
    return
  }
}

</mosaic_0001>

<llo_original>
// kernel: _fused_lsgan_loss.1
$region0: #{_fused_lsgan_loss.1}
  #allocation0 [shape = 'u32[]', space=smem, size = 0x4, offset = 0x4, fixed_abs, tag = 'smem constant byte address 0x4 - core index']
  #allocation1 [shape = 'u32[144,128]{1,0:T(1,128)}', space=vmem, size = 0x12000, scoped, tag = 'internal scratch']
  #allocation2 [shape = 'f32[1,8,16,16]{3,2,1,0:T(8,128)}', space=vmem, size = 0x10000, scoped, tag = 'scratch operand']
  #allocation3 [shape = 's32[1]{0}', space=sflag, size = 0x4, scoped, tag = 'scratch operand']
  #allocation4 [shape = 'f32[1,8,16,16]{3,2,1,0:T(8,128)}', space=vmem, size = 0x10000, scoped, tag = 'scratch operand']
  #allocation5 [shape = 's32[1]{0}', space=sflag, size = 0x4, scoped, tag = 'scratch operand']
  #allocation6 [shape = 'f32[1,8,8,8]{3,2,1,0:T(8,128)}', space=vmem, size = 0x8000, scoped, tag = 'scratch operand']
  #allocation7 [shape = 's32[1]{0}', space=sflag, size = 0x4, scoped, tag = 'scratch operand']
  #allocation8 [shape = 'f32[1,8,8,8]{3,2,1,0:T(8,128)}', space=vmem, size = 0x8000, scoped, tag = 'scratch operand']
  #allocation9 [shape = 's32[1]{0}', space=sflag, size = 0x4, scoped, tag = 'scratch operand']
  #allocation10 [shape = 'f32[1,8,16,16]{3,2,1,0:T(8,128)}', space=vmem, size = 0x10000, scoped, tag = 'scratch operand']
  #allocation11 [shape = 's32[1]{0}', space=sflag, size = 0x4, scoped, tag = 'scratch operand']
  #allocation12 [shape = 'f32[1,8,16,16]{3,2,1,0:T(8,128)}', space=vmem, size = 0x10000, scoped, tag = 'scratch operand']
  #allocation13 [shape = 's32[1]{0}', space=sflag, size = 0x4, scoped, tag = 'scratch operand']
  #allocation14 [shape = 'f32[1,8,8,8]{3,2,1,0:T(8,128)}', space=vmem, size = 0x8000, scoped, tag = 'scratch operand']
  #allocation15 [shape = 's32[1]{0}', space=sflag, size = 0x4, scoped, tag = 'scratch operand']
  #allocation16 [shape = 'f32[1,8,8,8]{3,2,1,0:T(8,128)}', space=vmem, size = 0x8000, scoped, tag = 'scratch operand']
  #allocation17 [shape = 's32[1]{0}', space=sflag, size = 0x4, scoped, tag = 'scratch operand']
  #allocation20 [shape = 's32[]', space=sflag, size = 0x4, offset = 0, fixed_abs, tag = 'sflag constant byte address 0x0 - dummy sync flag']
  #allocation21 [shape = 's32[]', space=sflag, size = 0x4, offset = 0, fixed_abs, tag = 'sflag constant byte address 0x0 - dummy sync flag']
  #allocation22 [shape = 'u32[]', space=smem, size = 0x4, offset = 0x44, fixed_abs, tag = 'smem constant byte address 0x44 - assertion arg 0']
  #allocation23 [shape = 'u32[]', space=smem, size = 0x4, offset = 0x48, fixed_abs, tag = 'smem constant byte address 0x48 - assertion arg 1']
  #allocation24 [shape = 's32[]', space=sflag, size = 0x4, offset = 0, fixed_abs, tag = 'sflag constant byte address 0x0 - dummy sync flag']
  #allocation25 [shape = 's32[]', space=sflag, size = 0x4, offset = 0, fixed_abs, tag = 'sflag constant byte address 0x0 - dummy sync flag']
  #allocation26 [shape = 's32[]', space=sflag, size = 0x4, offset = 0, fixed_abs, tag = 'sflag constant byte address 0x0 - dummy sync flag']
  #allocation27 [shape = 's32[]', space=sflag, size = 0x4, offset = 0, fixed_abs, tag = 'sflag constant byte address 0x0 - dummy sync flag']
  #allocation28 [shape = 's32[]', space=sflag, size = 0x4, offset = 0, fixed_abs, tag = 'sflag constant byte address 0x0 - dummy sync flag']
  #allocation29 [shape = 's32[]', space=sflag, size = 0x4, offset = 0, fixed_abs, tag = 'sflag constant byte address 0x0 - dummy sync flag']
  #allocation30 [shape = 's32[]', space=sflag, size = 0x4, offset = 0, fixed_abs, tag = 'sflag constant byte address 0x0 - dummy sync flag']
  #allocation31 [shape = 's32[]', space=sflag, size = 0x4, offset = 0, fixed_abs, tag = 'sflag constant byte address 0x0 - dummy sync flag']
  #allocation32 [shape = 's32[]', space=sflag, size = 0x4, offset = 0, fixed_abs, tag = 'sflag constant byte address 0x0 - dummy sync flag']
  #allocation33 [shape = 's32[]', space=sflag, size = 0x4, offset = 0, fixed_abs, tag = 'sflag constant byte address 0x0 - dummy sync flag']
  #allocation34 [shape = 's32[]', space=sflag, size = 0x4, offset = 0, fixed_abs, tag = 'sflag constant byte address 0x0 - dummy sync flag']
  #allocation35 [shape = 's32[]', space=sflag, size = 0x4, offset = 0, fixed_abs, tag = 'sflag constant byte address 0x0 - dummy sync flag']
  #allocation36 [shape = 's32[]', space=sflag, size = 0x4, offset = 0, fixed_abs, tag = 'sflag constant byte address 0x0 - dummy sync flag']
  #allocation37 [shape = 's32[]', space=sflag, size = 0x4, offset = 0, fixed_abs, tag = 'sflag constant byte address 0x0 - dummy sync flag']
  %s0 = inlined_call_operand.hbm [shape: f32[8,16,16], index: 0, kind: input, shape index: {}]
  %s1 = inlined_call_operand.hbm [shape: f32[8,16,16], index: 1, kind: input, shape index: {}]
  %s2 = inlined_call_operand.hbm [shape: f32[8,8,8], index: 2, kind: input, shape index: {}]
  %s3 = inlined_call_operand.hbm [shape: f32[8,8,8], index: 3, kind: input, shape index: {}]
  %s4 = inlined_call_operand.hbm [shape: f32[8,16,16], index: 4, kind: input, shape index: {}]
  %s5 = inlined_call_operand.hbm [shape: f32[8,16,16], index: 5, kind: input, shape index: {}]
  %s6 = inlined_call_operand.hbm [shape: f32[8,8,8], index: 6, kind: input, shape index: {}]
  %s7 = inlined_call_operand.hbm [shape: f32[8,8,8], index: 7, kind: input, shape index: {}]
  %s8 = inlined_call_operand.vmem [shape: f32[8], index: 8, kind: output, shape index: {}]
  %s9 = sld [smem:[#allocation0]]
  $region42: #{_fused_lsgan_loss.1} parent=0
    _
  %s11 = ssub.s32 1, %s9
  %s12 = scalar_select 0, %s11, %s9
  $region1: #{_fused_lsgan_loss.1} parent=0
    #allocation18 [shape = 'u8[512]{0}', space=smem, size = 0x200, scoped, tag = 'output window, operand 0, single buffered']
    #allocation19 [shape = 's32[1]{0}', space=sflag, size = 0x4, scoped, tag = 'scoped memory for _fused_lsgan_loss.1']
    %13 = vsyncpa [#allocation19], 0
    // Predicated region
    $region2: #{_fused_lsgan_loss.1} parent=1 // pred_check
      _
    $region3: #{_fused_lsgan_loss.1} parent=1 // pred_check_branch
      %15 = sbr.rel target = $region5
    $region4: #{_fused_lsgan_loss.1} parent=1 // pred_region
      %16 = sst [smem:[#allocation22]] [#allocation21]
      %17 = sst [smem:[#allocation23]] [#allocation20]
    $region5: #{_fused_lsgan_loss.1} parent=1 // pred_fallthru
      _
    %19 = shalt.err (0)
    %s21 = sshll.u32 [#allocation2], 4
    %s22 = int_to_ptr.vmem [resolvable:$true] %s21
    %24 = dma.hbm_to_vmem [thread:$0]  %s0, 2048, %s22, [#allocation3]
    // Predicated region
    $region6: #{_fused_lsgan_loss.1} parent=1 // pred_check
      _
    $region7: #{_fused_lsgan_loss.1} parent=1 // pred_check_branch
      %26 = sbr.rel target = $region9
    $region8: #{_fused_lsgan_loss.1} parent=1 // pred_region
      %27 = sst [smem:[#allocation22]] [#allocation25]
      %28 = sst [smem:[#allocation23]] [#allocation24]
    $region9: #{_fused_lsgan_loss.1} parent=1 // pred_fallthru
      _
    %30 = shalt.err (0)
    %s32 = sshll.u32 [#allocation4], 4
    %s33 = int_to_ptr.vmem [resolvable:$true] %s32
    %35 = dma.hbm_to_vmem [thread:$0]  %s1, 2048, %s33, [#allocation5]
    // Predicated region
    $region10: #{_fused_lsgan_loss.1} parent=1 // pred_check
      _
    $region11: #{_fused_lsgan_loss.1} parent=1 // pred_check_branch
      %37 = sbr.rel target = $region13
    $region12: #{_fused_lsgan_loss.1} parent=1 // pred_region
      %38 = sst [smem:[#allocation22]] [#allocation27]
      %39 = sst [smem:[#allocation23]] [#allocation26]
    $region13: #{_fused_lsgan_loss.1} parent=1 // pred_fallthru
      _
    %41 = shalt.err (0)
    %s43 = sshll.u32 [#allocation6], 4
    %s44 = int_to_ptr.vmem [resolvable:$true] %s43
    %46 = dma.hbm_to_vmem [thread:$0]  %s2, 1024, %s44, [#allocation7]
    // Predicated region
    $region14: #{_fused_lsgan_loss.1} parent=1 // pred_check
      _
    $region15: #{_fused_lsgan_loss.1} parent=1 // pred_check_branch
      %48 = sbr.rel target = $region17
    $region16: #{_fused_lsgan_loss.1} parent=1 // pred_region
      %49 = sst [smem:[#allocation22]] [#allocation29]
      %50 = sst [smem:[#allocation23]] [#allocation28]
    $region17: #{_fused_lsgan_loss.1} parent=1 // pred_fallthru
      _
    %52 = shalt.err (0)
    %s54 = sshll.u32 [#allocation8], 4
    %s55 = int_to_ptr.vmem [resolvable:$true] %s54
    %57 = dma.hbm_to_vmem [thread:$0]  %s3, 1024, %s55, [#allocation9]
    // Predicated region
    $region18: #{_fused_lsgan_loss.1} parent=1 // pred_check
      _
    $region19: #{_fused_lsgan_loss.1} parent=1 // pred_check_branch
      %59 = sbr.rel target = $region21
    $region20: #{_fused_lsgan_loss.1} parent=1 // pred_region
      %60 = sst [smem:[#allocation22]] [#allocation31]
      %61 = sst [smem:[#allocation23]] [#allocation30]
    $region21: #{_fused_lsgan_loss.1} parent=1 // pred_fallthru
      _
    %63 = shalt.err (0)
    %s65 = sshll.u32 [#allocation10], 4
    %s66 = int_to_ptr.vmem [resolvable:$true] %s65
    %68 = dma.hbm_to_vmem [thread:$0]  %s4, 2048, %s66, [#allocation11]
    // Predicated region
    $region22: #{_fused_lsgan_loss.1} parent=1 // pred_check
      _
    $region23: #{_fused_lsgan_loss.1} parent=1 // pred_check_branch
      %70 = sbr.rel target = $region25
    $region24: #{_fused_lsgan_loss.1} parent=1 // pred_region
      %71 = sst [smem:[#allocation22]] [#allocation33]
      %72 = sst [smem:[#allocation23]] [#allocation32]
    $region25: #{_fused_lsgan_loss.1} parent=1 // pred_fallthru
      _
    %74 = shalt.err (0)
    %s76 = sshll.u32 [#allocation12], 4
    %s77 = int_to_ptr.vmem [resolvable:$true] %s76
    %79 = dma.hbm_to_vmem [thread:$0]  %s5, 2048, %s77, [#allocation13]
    // Predicated region
    $region26: #{_fused_lsgan_loss.1} parent=1 // pred_check
      _
    $region27: #{_fused_lsgan_loss.1} parent=1 // pred_check_branch
      %81 = sbr.rel target = $region29
    $region28: #{_fused_lsgan_loss.1} parent=1 // pred_region
      %82 = sst [smem:[#allocation22]] [#allocation35]
      %83 = sst [smem:[#allocation23]] [#allocation34]
    $region29: #{_fused_lsgan_loss.1} parent=1 // pred_fallthru
      _
    %85 = shalt.err (0)
    %s87 = sshll.u32 [#allocation14], 4
    %s88 = int_to_ptr.vmem [resolvable:$true] %s87
    %90 = dma.hbm_to_vmem [thread:$0]  %s6, 1024, %s88, [#allocation15]
    // Predicated region
    $region30: #{_fused_lsgan_loss.1} parent=1 // pred_check
      _
    $region31: #{_fused_lsgan_loss.1} parent=1 // pred_check_branch
      %92 = sbr.rel target = $region33
    $region32: #{_fused_lsgan_loss.1} parent=1 // pred_region
      %93 = sst [smem:[#allocation22]] [#allocation37]
      %94 = sst [smem:[#allocation23]] [#allocation36]
    $region33: #{_fused_lsgan_loss.1} parent=1 // pred_fallthru
      _
    %96 = shalt.err (0)
    %s98 = sshll.u32 [#allocation16], 4
    %s99 = int_to_ptr.vmem [resolvable:$true] %s98
    %101 = dma.hbm_to_vmem [thread:$0]  %s7, 1024, %s99, [#allocation17]
    %s102 = smul.u32 8, 16
    %s103 = smul.u32 %s102, 1
    %s104 = sshll.u32 %s103, 4
    %105 = dma.done [#allocation3], %s104
    %v106 = vld [vmem:[#allocation2] sm:$0xff]
    %v107 = vld [vmem:[#allocation2 + $0x8] sm:$0xff]
    %v108 = vld [vmem:[#allocation2 + $0x10] sm:$0xff]
    %v109 = vld [vmem:[#allocation2 + $0x18] sm:$0xff]
    %v110 = vld [vmem:[#allocation2 + $0x20] sm:$0xff]
    %v111 = vld [vmem:[#allocation2 + $0x28] sm:$0xff]
    %v112 = vld [vmem:[#allocation2 + $0x30] sm:$0xff]
    %v113 = vld [vmem:[#allocation2 + $0x38] sm:$0xff]
    %v114 = vld [vmem:[#allocation2 + $0x40] sm:$0xff]
    %v115 = vld [vmem:[#allocation2 + $0x48] sm:$0xff]
    %v116 = vld [vmem:[#allocation2 + $0x50] sm:$0xff]
    %v117 = vld [vmem:[#allocation2 + $0x58] sm:$0xff]
    %v118 = vld [vmem:[#allocation2 + $0x60] sm:$0xff]
    %v119 = vld [vmem:[#allocation2 + $0x68] sm:$0xff]
    %v120 = vld [vmem:[#allocation2 + $0x70] sm:$0xff]
    %v121 = vld [vmem:[#allocation2 + $0x78] sm:$0xff]
    %v122 = vmul.f32 %v106, %v106
    %v123 = vmul.f32 %v107, %v107
    %v124 = vmul.f32 %v108, %v108
    %v125 = vmul.f32 %v109, %v109
    %v126 = vmul.f32 %v110, %v110
    %v127 = vmul.f32 %v111, %v111
    %v128 = vmul.f32 %v112, %v112
    %v129 = vmul.f32 %v113, %v113
    %v130 = vmul.f32 %v114, %v114
    %v131 = vmul.f32 %v115, %v115
    %v132 = vmul.f32 %v116, %v116
    %v133 = vmul.f32 %v117, %v117
    %v134 = vmul.f32 %v118, %v118
    %v135 = vmul.f32 %v119, %v119
    %v136 = vmul.f32 %v120, %v120
    %v137 = vmul.f32 %v121, %v121
    %vm138 = vcmask 130048
    %v139 = vsel %vm138, %v122, 0.0
    %v140 = vsel %vm138, %v123, 0.0
    %v141 = vadd.f32 %v139, %v140
    %v142 = vsel %vm138, %v124, 0.0
    %v143 = vadd.f32 %v141, %v142
    %v144 = vsel %vm138, %v125, 0.0
    %v145 = vadd.f32 %v143, %v144
    %v146 = vsel %vm138, %v126, 0.0
    %v147 = vadd.f32 %v145, %v146
    %v148 = vsel %vm138, %v127, 0.0
    %v149 = vadd.f32 %v147, %v148
    %v150 = vsel %vm138, %v128, 0.0
    %v151 = vadd.f32 %v149, %v150
    %v152 = vsel %vm138, %v129, 0.0
    %v153 = vadd.f32 %v151, %v152
    %v154 = vsel %vm138, %v130, 0.0
    %v155 = vadd.f32 %v153, %v154
    %v156 = vsel %vm138, %v131, 0.0
    %v157 = vadd.f32 %v155, %v156
    %v158 = vsel %vm138, %v132, 0.0
    %v159 = vadd.f32 %v157, %v158
    %v160 = vsel %vm138, %v133, 0.0
    %v161 = vadd.f32 %v159, %v160
    %v162 = vsel %vm138, %v134, 0.0
    %v163 = vadd.f32 %v161, %v162
    %v164 = vsel %vm138, %v135, 0.0
    %v165 = vadd.f32 %v163, %v164
    %v166 = vsel %vm138, %v136, 0.0
    %v167 = vadd.f32 %v165, %v166
    %v168 = vsel %vm138, %v137, 0.0
    %v169 = vadd.f32 %v167, %v168
    %170 = vadd.xlane.f32.xlu0 %v169
    %v171 = vpop.xlane.xlu0 %170
    %v172 = vrot.slane %v171, 4
    %v173 = vadd.f32 %v171, %v172
    %v174 = vrot.slane %v173, 2
    %v175 = vadd.f32 %v173, %v174
    %v176 = vrot.slane %v175, 1
    %v177 = vadd.f32 %v175, %v176
    %s178 = vtos %v177
    %s179 = sadd.f32 %s178, 0.0
    %s180 = smul.f32 %s179, 0.00048828125
    %s181 = scalar_lea.smem [#allocation18], 0
    %182 = sst [smem:[%s181]] %s180
    %s183 = sshll.u32 %s103, 4
    %184 = dma.done [#allocation5], %s183
    %v185 = vld [vmem:[#allocation4] sm:$0xff]
    %v186 = vld [vmem:[#allocation4 + $0x8] sm:$0xff]
    %v187 = vld [vmem:[#allocation4 + $0x10] sm:$0xff]
    %v188 = vld [vmem:[#allocation4 + $0x18] sm:$0xff]
    %v189 = vld [vmem:[#allocation4 + $0x20] sm:$0xff]
    %v190 = vld [vmem:[#allocation4 + $0x28] sm:$0xff]
    %v191 = vld [vmem:[#allocation4 + $0x30] sm:$0xff]
    %v192 = vld [vmem:[#allocation4 + $0x38] sm:$0xff]
    %v193 = vld [vmem:[#allocation4 + $0x40] sm:$0xff]
    %v194 = vld [vmem:[#allocation4 + $0x48] sm:$0xff]
    %v195 = vld [vmem:[#allocation4 + $0x50] sm:$0xff]
    %v196 = vld [vmem:[#allocation4 + $0x58] sm:$0xff]
    %v197 = vld [vmem:[#allocation4 + $0x60] sm:$0xff]
    %v198 = vld [vmem:[#allocation4 + $0x68] sm:$0xff]
    %v199 = vld [vmem:[#allocation4 + $0x70] sm:$0xff]
    %v200 = vld [vmem:[#allocation4 + $0x78] sm:$0xff]
    %v201 = vsub.f32 %v185, 1.0
    %v202 = vsub.f32 %v186, 1.0
    %v203 = vsub.f32 %v187, 1.0
    %v204 = vsub.f32 %v188, 1.0
    %v205 = vsub.f32 %v189, 1.0
    %v206 = vsub.f32 %v190, 1.0
    %v207 = vsub.f32 %v191, 1.0
    %v208 = vsub.f32 %v192, 1.0
    %v209 = vsub.f32 %v193, 1.0
    %v210 = vsub.f32 %v194, 1.0
    %v211 = vsub.f32 %v195, 1.0
    %v212 = vsub.f32 %v196, 1.0
    %v213 = vsub.f32 %v197, 1.0
    %v214 = vsub.f32 %v198, 1.0
    %v215 = vsub.f32 %v199, 1.0
    %v216 = vsub.f32 %v200, 1.0
    %v217 = vmul.f32 %v201, %v201
    %v218 = vmul.f32 %v202, %v202
    %v219 = vmul.f32 %v203, %v203
    %v220 = vmul.f32 %v204, %v204
    %v221 = vmul.f32 %v205, %v205
    %v222 = vmul.f32 %v206, %v206
    %v223 = vmul.f32 %v207, %v207
    %v224 = vmul.f32 %v208, %v208
    %v225 = vmul.f32 %v209, %v209
    %v226 = vmul.f32 %v210, %v210
    %v227 = vmul.f32 %v211, %v211
    %v228 = vmul.f32 %v212, %v212
    %v229 = vmul.f32 %v213, %v213
    %v230 = vmul.f32 %v214, %v214
    %v231 = vmul.f32 %v215, %v215
    %v232 = vmul.f32 %v216, %v216
    %v233 = vsel %vm138, %v217, 0.0
    %v234 = vsel %vm138, %v218, 0.0
    %v235 = vadd.f32 %v233, %v234
    %v236 = vsel %vm138, %v219, 0.0
    %v237 = vadd.f32 %v235, %v236
    %v238 = vsel %vm138, %v220, 0.0
    %v239 = vadd.f32 %v237, %v238
    %v240 = vsel %vm138, %v221, 0.0
    %v241 = vadd.f32 %v239, %v240
    %v242 = vsel %vm138, %v222, 0.0
    %v243 = vadd.f32 %v241, %v242
    %v244 = vsel %vm138, %v223, 0.0
    %v245 = vadd.f32 %v243, %v244
    %v246 = vsel %vm138, %v224, 0.0
    %v247 = vadd.f32 %v245, %v246
    %v248 = vsel %vm138, %v225, 0.0
    %v249 = vadd.f32 %v247, %v248
    %v250 = vsel %vm138, %v226, 0.0
    %v251 = vadd.f32 %v249, %v250
    %v252 = vsel %vm138, %v227, 0.0
    %v253 = vadd.f32 %v251, %v252
    %v254 = vsel %vm138, %v228, 0.0
    %v255 = vadd.f32 %v253, %v254
    %v256 = vsel %vm138, %v229, 0.0
    %v257 = vadd.f32 %v255, %v256
    %v258 = vsel %vm138, %v230, 0.0
    %v259 = vadd.f32 %v257, %v258
    %v260 = vsel %vm138, %v231, 0.0
    %v261 = vadd.f32 %v259, %v260
    %v262 = vsel %vm138, %v232, 0.0
    %v263 = vadd.f32 %v261, %v262
    %264 = vadd.xlane.f32.xlu0 %v263
    %v265 = vpop.xlane.xlu0 %264
    %v266 = vrot.slane %v265, 4
    %v267 = vadd.f32 %v265, %v266
    %v268 = vrot.slane %v267, 2
    %v269 = vadd.f32 %v267, %v268
    %v270 = vrot.slane %v269, 1
    %v271 = vadd.f32 %v269, %v270
    %s272 = vtos %v271
    %s273 = sadd.f32 %s272, 0.0
    %s274 = smul.f32 %s273, 0.00048828125
    %s275 = scalar_lea.smem [#allocation18], 1
    %276 = sst [smem:[%s275]] %s274
    %s277 = smul.u32 8, 8
    %s278 = smul.u32 %s277, 1
    %s279 = sshll.u32 %s278, 4
    %280 = dma.done [#allocation7], %s279
    %v281 = vld [vmem:[#allocation6] sm:$0xff]
    %v282 = vld [vmem:[#allocation6 + $0x8] sm:$0xff]
    %v283 = vld [vmem:[#allocation6 + $0x10] sm:$0xff]
    %v284 = vld [vmem:[#allocation6 + $0x18] sm:$0xff]
    %v285 = vld [vmem:[#allocation6 + $0x20] sm:$0xff]
    %v286 = vld [vmem:[#allocation6 + $0x28] sm:$0xff]
    %v287 = vld [vmem:[#allocation6 + $0x30] sm:$0xff]
    %v288 = vld [vmem:[#allocation6 + $0x38] sm:$0xff]
    %v289 = vmul.f32 %v281, %v281
    %v290 = vmul.f32 %v282, %v282
    %v291 = vmul.f32 %v283, %v283
    %v292 = vmul.f32 %v284, %v284
    %v293 = vmul.f32 %v285, %v285
    %v294 = vmul.f32 %v286, %v286
    %v295 = vmul.f32 %v287, %v287
    %v296 = vmul.f32 %v288, %v288
    %vm297 = vcmask 64512
    %v298 = vsel %vm297, %v289, 0.0
    %v299 = vsel %vm297, %v290, 0.0
    %v300 = vadd.f32 %v298, %v299
    %v301 = vsel %vm297, %v291, 0.0
    %v302 = vadd.f32 %v300, %v301
    %v303 = vsel %vm297, %v292, 0.0
    %v304 = vadd.f32 %v302, %v303
    %v305 = vsel %vm297, %v293, 0.0
    %v306 = vadd.f32 %v304, %v305
    %v307 = vsel %vm297, %v294, 0.0
    %v308 = vadd.f32 %v306, %v307
    %v309 = vsel %vm297, %v295, 0.0
    %v310 = vadd.f32 %v308, %v309
    %v311 = vsel %vm297, %v296, 0.0
    %v312 = vadd.f32 %v310, %v311
    %313 = vadd.xlane.f32.xlu0 %v312
    %v314 = vpop.xlane.xlu0 %313
    %v315 = vrot.slane %v314, 4
    %v316 = vadd.f32 %v314, %v315
    %v317 = vrot.slane %v316, 2
    %v318 = vadd.f32 %v316, %v317
    %v319 = vrot.slane %v318, 1
    %v320 = vadd.f32 %v318, %v319
    %s321 = vtos %v320
    %s322 = sadd.f32 %s321, 0.0
    %s323 = smul.f32 %s322, 0.001953125
    %s324 = scalar_lea.smem [#allocation18], 2
    %325 = sst [smem:[%s324]] %s323
    %s326 = sshll.u32 %s278, 4
    %327 = dma.done [#allocation9], %s326
    %v328 = vld [vmem:[#allocation8] sm:$0xff]
    %v329 = vld [vmem:[#allocation8 + $0x8] sm:$0xff]
    %v330 = vld [vmem:[#allocation8 + $0x10] sm:$0xff]
    %v331 = vld [vmem:[#allocation8 + $0x18] sm:$0xff]
    %v332 = vld [vmem:[#allocation8 + $0x20] sm:$0xff]
    %v333 = vld [vmem:[#allocation8 + $0x28] sm:$0xff]
    %v334 = vld [vmem:[#allocation8 + $0x30] sm:$0xff]
    %v335 = vld [vmem:[#allocation8 + $0x38] sm:$0xff]
    %v336 = vsub.f32 %v328, 1.0
    %v337 = vsub.f32 %v329, 1.0
    %v338 = vsub.f32 %v330, 1.0
    %v339 = vsub.f32 %v331, 1.0
    %v340 = vsub.f32 %v332, 1.0
    %v341 = vsub.f32 %v333, 1.0
    %v342 = vsub.f32 %v334, 1.0
    %v343 = vsub.f32 %v335, 1.0
    %v344 = vmul.f32 %v336, %v336
    %v345 = vmul.f32 %v337, %v337
    %v346 = vmul.f32 %v338, %v338
    %v347 = vmul.f32 %v339, %v339
    %v348 = vmul.f32 %v340, %v340
    %v349 = vmul.f32 %v341, %v341
    %v350 = vmul.f32 %v342, %v342
    %v351 = vmul.f32 %v343, %v343
    %v352 = vsel %vm297, %v344, 0.0
    %v353 = vsel %vm297, %v345, 0.0
    %v354 = vadd.f32 %v352, %v353
    %v355 = vsel %vm297, %v346, 0.0
    %v356 = vadd.f32 %v354, %v355
    %v357 = vsel %vm297, %v347, 0.0
    %v358 = vadd.f32 %v356, %v357
    %v359 = vsel %vm297, %v348, 0.0
    %v360 = vadd.f32 %v358, %v359
    %v361 = vsel %vm297, %v349, 0.0
    %v362 = vadd.f32 %v360, %v361
    %v363 = vsel %vm297, %v350, 0.0
    %v364 = vadd.f32 %v362, %v363
    %v365 = vsel %vm297, %v351, 0.0
    %v366 = vadd.f32 %v364, %v365
    %367 = vadd.xlane.f32.xlu0 %v366
    %v368 = vpop.xlane.xlu0 %367
    %v369 = vrot.slane %v368, 4
    %v370 = vadd.f32 %v368, %v369
    %v371 = vrot.slane %v370, 2
    %v372 = vadd.f32 %v370, %v371
    %v373 = vrot.slane %v372, 1
    %v374 = vadd.f32 %v372, %v373
    %s375 = vtos %v374
    %s376 = sadd.f32 %s375, 0.0
    %s377 = smul.f32 %s376, 0.001953125
    %s378 = scalar_lea.smem [#allocation18], 3
    %379 = sst [smem:[%s378]] %s377
    %s380 = sshll.u32 %s103, 4
    %381 = dma.done [#allocation11], %s380
    %v382 = vld [vmem:[#allocation10] sm:$0xff]
    %v383 = vld [vmem:[#allocation10 + $0x8] sm:$0xff]
    %v384 = vld [vmem:[#allocation10 + $0x10] sm:$0xff]
    %v385 = vld [vmem:[#allocation10 + $0x18] sm:$0xff]
    %v386 = vld [vmem:[#allocation10 + $0x20] sm:$0xff]
    %v387 = vld [vmem:[#allocation10 + $0x28] sm:$0xff]
    %v388 = vld [vmem:[#allocation10 + $0x30] sm:$0xff]
    %v389 = vld [vmem:[#allocation10 + $0x38] sm:$0xff]
    %v390 = vld [vmem:[#allocation10 + $0x40] sm:$0xff]
    %v391 = vld [vmem:[#allocation10 + $0x48] sm:$0xff]
    %v392 = vld [vmem:[#allocation10 + $0x50] sm:$0xff]
    %v393 = vld [vmem:[#allocation10 + $0x58] sm:$0xff]
    %v394 = vld [vmem:[#allocation10 + $0x60] sm:$0xff]
    %v395 = vld [vmem:[#allocation10 + $0x68] sm:$0xff]
    %v396 = vld [vmem:[#allocation10 + $0x70] sm:$0xff]
    %v397 = vld [vmem:[#allocation10 + $0x78] sm:$0xff]
    %v398 = vmul.f32 %v382, %v382
    %v399 = vmul.f32 %v383, %v383
    %v400 = vmul.f32 %v384, %v384
    %v401 = vmul.f32 %v385, %v385
    %v402 = vmul.f32 %v386, %v386
    %v403 = vmul.f32 %v387, %v387
    %v404 = vmul.f32 %v388, %v388
    %v405 = vmul.f32 %v389, %v389
    %v406 = vmul.f32 %v390, %v390
    %v407 = vmul.f32 %v391, %v391
    %v408 = vmul.f32 %v392, %v392
    %v409 = vmul.f32 %v393, %v393
    %v410 = vmul.f32 %v394, %v394
    %v411 = vmul.f32 %v395, %v395
    %v412 = vmul.f32 %v396, %v396
    %v413 = vmul.f32 %v397, %v397
    %v414 = vsel %vm138, %v398, 0.0
    %v415 = vsel %vm138, %v399, 0.0
    %v416 = vadd.f32 %v414, %v415
    %v417 = vsel %vm138, %v400, 0.0
    %v418 = vadd.f32 %v416, %v417
    %v419 = vsel %vm138, %v401, 0.0
    %v420 = vadd.f32 %v418, %v419
    %v421 = vsel %vm138, %v402, 0.0
    %v422 = vadd.f32 %v420, %v421
    %v423 = vsel %vm138, %v403, 0.0
    %v424 = vadd.f32 %v422, %v423
    %v425 = vsel %vm138, %v404, 0.0
    %v426 = vadd.f32 %v424, %v425
    %v427 = vsel %vm138, %v405, 0.0
    %v428 = vadd.f32 %v426, %v427
    %v429 = vsel %vm138, %v406, 0.0
    %v430 = vadd.f32 %v428, %v429
    %v431 = vsel %vm138, %v407, 0.0
    %v432 = vadd.f32 %v430, %v431
    %v433 = vsel %vm138, %v408, 0.0
    %v434 = vadd.f32 %v432, %v433
    %v435 = vsel %vm138, %v409, 0.0
    %v436 = vadd.f32 %v434, %v435
    %v437 = vsel %vm138, %v410, 0.0
    %v438 = vadd.f32 %v436, %v437
    %v439 = vsel %vm138, %v411, 0.0
    %v440 = vadd.f32 %v438, %v439
    %v441 = vsel %vm138, %v412, 0.0
    %v442 = vadd.f32 %v440, %v441
    %v443 = vsel %vm138, %v413, 0.0
    %v444 = vadd.f32 %v442, %v443
    %445 = vadd.xlane.f32.xlu0 %v444
    %v446 = vpop.xlane.xlu0 %445
    %v447 = vrot.slane %v446, 4
    %v448 = vadd.f32 %v446, %v447
    %v449 = vrot.slane %v448, 2
    %v450 = vadd.f32 %v448, %v449
    %v451 = vrot.slane %v450, 1
    %v452 = vadd.f32 %v450, %v451
    %s453 = vtos %v452
    %s454 = sadd.f32 %s453, 0.0
    %s455 = smul.f32 %s454, 0.00048828125
    %s456 = scalar_lea.smem [#allocation18], 4
    %457 = sst [smem:[%s456]] %s455
    %s458 = sshll.u32 %s103, 4
    %459 = dma.done [#allocation13], %s458
    %v460 = vld [vmem:[#allocation12] sm:$0xff]
    %v461 = vld [vmem:[#allocation12 + $0x8] sm:$0xff]
    %v462 = vld [vmem:[#allocation12 + $0x10] sm:$0xff]
    %v463 = vld [vmem:[#allocation12 + $0x18] sm:$0xff]
    %v464 = vld [vmem:[#allocation12 + $0x20] sm:$0xff]
    %v465 = vld [vmem:[#allocation12 + $0x28] sm:$0xff]
    %v466 = vld [vmem:[#allocation12 + $0x30] sm:$0xff]
    %v467 = vld [vmem:[#allocation12 + $0x38] sm:$0xff]
    %v468 = vld [vmem:[#allocation12 + $0x40] sm:$0xff]
    %v469 = vld [vmem:[#allocation12 + $0x48] sm:$0xff]
    %v470 = vld [vmem:[#allocation12 + $0x50] sm:$0xff]
    %v471 = vld [vmem:[#allocation12 + $0x58] sm:$0xff]
    %v472 = vld [vmem:[#allocation12 + $0x60] sm:$0xff]
    %v473 = vld [vmem:[#allocation12 + $0x68] sm:$0xff]
    %v474 = vld [vmem:[#allocation12 + $0x70] sm:$0xff]
    %v475 = vld [vmem:[#allocation12 + $0x78] sm:$0xff]
    %v476 = vsub.f32 %v460, 1.0
    %v477 = vsub.f32 %v461, 1.0
    %v478 = vsub.f32 %v462, 1.0
    %v479 = vsub.f32 %v463, 1.0
    %v480 = vsub.f32 %v464, 1.0
    %v481 = vsub.f32 %v465, 1.0
    %v482 = vsub.f32 %v466, 1.0
    %v483 = vsub.f32 %v467, 1.0
    %v484 = vsub.f32 %v468, 1.0
    %v485 = vsub.f32 %v469, 1.0
    %v486 = vsub.f32 %v470, 1.0
    %v487 = vsub.f32 %v471, 1.0
    %v488 = vsub.f32 %v472, 1.0
    %v489 = vsub.f32 %v473, 1.0
    %v490 = vsub.f32 %v474, 1.0
    %v491 = vsub.f32 %v475, 1.0
    %v492 = vmul.f32 %v476, %v476
    %v493 = vmul.f32 %v477, %v477
    %v494 = vmul.f32 %v478, %v478
    %v495 = vmul.f32 %v479, %v479
    %v496 = vmul.f32 %v480, %v480
    %v497 = vmul.f32 %v481, %v481
    %v498 = vmul.f32 %v482, %v482
    %v499 = vmul.f32 %v483, %v483
    %v500 = vmul.f32 %v484, %v484
    %v501 = vmul.f32 %v485, %v485
    %v502 = vmul.f32 %v486, %v486
    %v503 = vmul.f32 %v487, %v487
    %v504 = vmul.f32 %v488, %v488
    %v505 = vmul.f32 %v489, %v489
    %v506 = vmul.f32 %v490, %v490
    %v507 = vmul.f32 %v491, %v491
    %v508 = vsel %vm138, %v492, 0.0
    %v509 = vsel %vm138, %v493, 0.0
    %v510 = vadd.f32 %v508, %v509
    %v511 = vsel %vm138, %v494, 0.0
    %v512 = vadd.f32 %v510, %v511
    %v513 = vsel %vm138, %v495, 0.0
    %v514 = vadd.f32 %v512, %v513
    %v515 = vsel %vm138, %v496, 0.0
    %v516 = vadd.f32 %v514, %v515
    %v517 = vsel %vm138, %v497, 0.0
    %v518 = vadd.f32 %v516, %v517
    %v519 = vsel %vm138, %v498, 0.0
    %v520 = vadd.f32 %v518, %v519
    %v521 = vsel %vm138, %v499, 0.0
    %v522 = vadd.f32 %v520, %v521
    %v523 = vsel %vm138, %v500, 0.0
    %v524 = vadd.f32 %v522, %v523
    %v525 = vsel %vm138, %v501, 0.0
    %v526 = vadd.f32 %v524, %v525
    %v527 = vsel %vm138, %v502, 0.0
    %v528 = vadd.f32 %v526, %v527
    %v529 = vsel %vm138, %v503, 0.0
    %v530 = vadd.f32 %v528, %v529
    %v531 = vsel %vm138, %v504, 0.0
    %v532 = vadd.f32 %v530, %v531
    %v533 = vsel %vm138, %v505, 0.0
    %v534 = vadd.f32 %v532, %v533
    %v535 = vsel %vm138, %v506, 0.0
    %v536 = vadd.f32 %v534, %v535
    %v537 = vsel %vm138, %v507, 0.0
    %v538 = vadd.f32 %v536, %v537
    %539 = vadd.xlane.f32.xlu0 %v538
    %v540 = vpop.xlane.xlu0 %539
    %v541 = vrot.slane %v540, 4
    %v542 = vadd.f32 %v540, %v541
    %v543 = vrot.slane %v542, 2
    %v544 = vadd.f32 %v542, %v543
    %v545 = vrot.slane %v544, 1
    %v546 = vadd.f32 %v544, %v545
    %s547 = vtos %v546
    %s548 = sadd.f32 %s547, 0.0
    %s549 = smul.f32 %s548, 0.00048828125
    %s550 = scalar_lea.smem [#allocation18], 5
    %551 = sst [smem:[%s550]] %s549
    %s552 = sshll.u32 %s278, 4
    %553 = dma.done [#allocation15], %s552
    %v554 = vld [vmem:[#allocation14] sm:$0xff]
    %v555 = vld [vmem:[#allocation14 + $0x8] sm:$0xff]
    %v556 = vld [vmem:[#allocation14 + $0x10] sm:$0xff]
    %v557 = vld [vmem:[#allocation14 + $0x18] sm:$0xff]
    %v558 = vld [vmem:[#allocation14 + $0x20] sm:$0xff]
    %v559 = vld [vmem:[#allocation14 + $0x28] sm:$0xff]
    %v560 = vld [vmem:[#allocation14 + $0x30] sm:$0xff]
    %v561 = vld [vmem:[#allocation14 + $0x38] sm:$0xff]
    %v562 = vmul.f32 %v554, %v554
    %v563 = vmul.f32 %v555, %v555
    %v564 = vmul.f32 %v556, %v556
    %v565 = vmul.f32 %v557, %v557
    %v566 = vmul.f32 %v558, %v558
    %v567 = vmul.f32 %v559, %v559
    %v568 = vmul.f32 %v560, %v560
    %v569 = vmul.f32 %v561, %v561
    %v570 = vsel %vm297, %v562, 0.0
    %v571 = vsel %vm297, %v563, 0.0
    %v572 = vadd.f32 %v570, %v571
    %v573 = vsel %vm297, %v564, 0.0
    %v574 = vadd.f32 %v572, %v573
    %v575 = vsel %vm297, %v565, 0.0
    %v576 = vadd.f32 %v574, %v575
    %v577 = vsel %vm297, %v566, 0.0
    %v578 = vadd.f32 %v576, %v577
    %v579 = vsel %vm297, %v567, 0.0
    %v580 = vadd.f32 %v578, %v579
    %v581 = vsel %vm297, %v568, 0.0
    %v582 = vadd.f32 %v580, %v581
    %v583 = vsel %vm297, %v569, 0.0
    %v584 = vadd.f32 %v582, %v583
    %585 = vadd.xlane.f32.xlu0 %v584
    %v586 = vpop.xlane.xlu0 %585
    %v587 = vrot.slane %v586, 4
    %v588 = vadd.f32 %v586, %v587
    %v589 = vrot.slane %v588, 2
    %v590 = vadd.f32 %v588, %v589
    %v591 = vrot.slane %v590, 1
    %v592 = vadd.f32 %v590, %v591
    %s593 = vtos %v592
    %s594 = sadd.f32 %s593, 0.0
    %s595 = smul.f32 %s594, 0.001953125
    %s596 = scalar_lea.smem [#allocation18], 6
    %597 = sst [smem:[%s596]] %s595
    %s598 = sshll.u32 %s278, 4
    %599 = dma.done [#allocation17], %s598
    %v600 = vld [vmem:[#allocation16] sm:$0xff]
    %v601 = vld [vmem:[#allocation16 + $0x8] sm:$0xff]
    %v602 = vld [vmem:[#allocation16 + $0x10] sm:$0xff]
    %v603 = vld [vmem:[#allocation16 + $0x18] sm:$0xff]
    %v604 = vld [vmem:[#allocation16 + $0x20] sm:$0xff]
    %v605 = vld [vmem:[#allocation16 + $0x28] sm:$0xff]
    %v606 = vld [vmem:[#allocation16 + $0x30] sm:$0xff]
    %v607 = vld [vmem:[#allocation16 + $0x38] sm:$0xff]
    %v608 = vsub.f32 %v600, 1.0
    %v609 = vsub.f32 %v601, 1.0
    %v610 = vsub.f32 %v602, 1.0
    %v611 = vsub.f32 %v603, 1.0
    %v612 = vsub.f32 %v604, 1.0
    %v613 = vsub.f32 %v605, 1.0
    %v614 = vsub.f32 %v606, 1.0
    %v615 = vsub.f32 %v607, 1.0
    %v616 = vmul.f32 %v608, %v608
    %v617 = vmul.f32 %v609, %v609
    %v618 = vmul.f32 %v610, %v610
    %v619 = vmul.f32 %v611, %v611
    %v620 = vmul.f32 %v612, %v612
    %v621 = vmul.f32 %v613, %v613
    %v622 = vmul.f32 %v614, %v614
    %v623 = vmul.f32 %v615, %v615
    %v624 = vsel %vm297, %v616, 0.0
    %v625 = vsel %vm297, %v617, 0.0
    %v626 = vadd.f32 %v624, %v625
    %v627 = vsel %vm297, %v618, 0.0
    %v628 = vadd.f32 %v626, %v627
    %v629 = vsel %vm297, %v619, 0.0
    %v630 = vadd.f32 %v628, %v629
    %v631 = vsel %vm297, %v620, 0.0
    %v632 = vadd.f32 %v630, %v631
    %v633 = vsel %vm297, %v621, 0.0
    %v634 = vadd.f32 %v632, %v633
    %v635 = vsel %vm297, %v622, 0.0
    %v636 = vadd.f32 %v634, %v635
    %v637 = vsel %vm297, %v623, 0.0
    %v638 = vadd.f32 %v636, %v637
    %639 = vadd.xlane.f32.xlu0 %v638
    %v640 = vpop.xlane.xlu0 %639
    %v641 = vrot.slane %v640, 4
    %v642 = vadd.f32 %v640, %v641
    %v643 = vrot.slane %v642, 2
    %v644 = vadd.f32 %v642, %v643
    %v645 = vrot.slane %v644, 1
    %v646 = vadd.f32 %v644, %v645
    %s647 = vtos %v646
    %s648 = sadd.f32 %s647, 0.0
    %s649 = smul.f32 %s648, 0.001953125
    %s650 = scalar_lea.smem [#allocation18], 7
    %651 = sst [smem:[%s650]] %s649
    // Predicated region
    $region34: #{_fused_lsgan_loss.1} parent=1 // pred_check
      _
    $region35: #{_fused_lsgan_loss.1} parent=1 // pred_check_branch
      %653 = sbr.rel (0) target = $region37
    $region36: #{_fused_lsgan_loss.1} parent=1 // pred_region
      %s655 = ssub.s32 16, 16
      %656 = vsyncadd [#allocation19], %s655
      %s658 = sshll.u32 %s8, 4
      %s659 = int_to_ptr.vmem [resolvable:$true] %s658
      %661 = dma.smem_to_vmem [#allocation18], 16, %s659, [#allocation19]
    $region37: #{_fused_lsgan_loss.1} parent=1 // pred_fallthru
      _
    // Predicated region
    $region38: #{_fused_lsgan_loss.1} parent=1 // pred_check
      _
    $region39: #{_fused_lsgan_loss.1} parent=1 // pred_check_branch
      %663 = sbr.rel (0) target = $region41
    $region40: #{_fused_lsgan_loss.1} parent=1 // pred_region
      %664 = dma.done [#allocation19], 16
    $region41: #{_fused_lsgan_loss.1} parent=1 // pred_fallthru
      _
    %665 = sfence
    %666 = vsyncpa [#allocation19], 1
  %667 = vsyncmov [#allocation3]
  %s668 = vpop.sfrf %667
  %p669 = scmp.eq.s32.totalorder %s668, 0
  %p670 = pneg %p669
  %672 = shalt.err (%p670)
  %673 = vsyncmov [#allocation5]
  %s674 = vpop.sfrf %673
  %p675 = scmp.eq.s32.totalorder %s674, 0
  %p676 = pneg %p675
  %678 = shalt.err (%p676)
  %679 = vsyncmov [#allocation7]
  %s680 = vpop.sfrf %679
  %p681 = scmp.eq.s32.totalorder %s680, 0
  %p682 = pneg %p681
  %684 = shalt.err (%p682)
  %685 = vsyncmov [#allocation9]
  %s686 = vpop.sfrf %685
  %p687 = scmp.eq.s32.totalorder %s686, 0
  %p688 = pneg %p687
  %690 = shalt.err (%p688)
  %691 = vsyncmov [#allocation11]
  %s692 = vpop.sfrf %691
  %p693 = scmp.eq.s32.totalorder %s692, 0
  %p694 = pneg %p693
  %696 = shalt.err (%p694)
  %697 = vsyncmov [#allocation13]
  %s698 = vpop.sfrf %697
  %p699 = scmp.eq.s32.totalorder %s698, 0
  %p700 = pneg %p699
  %702 = shalt.err (%p700)
  %703 = vsyncmov [#allocation15]
  %s704 = vpop.sfrf %703
  %p705 = scmp.eq.s32.totalorder %s704, 0
  %p706 = pneg %p705
  %708 = shalt.err (%p706)
  %709 = vsyncmov [#allocation17]
  %s710 = vpop.sfrf %709
  %p711 = scmp.eq.s32.totalorder %s710, 0
  %p712 = pneg %p711
  %714 = shalt.err (%p712)

</llo_original>
